<compile_context>
chip_gen: v7x
topology: tpu7x:2x2x1
jax: 0.10.0
libtpu: 0.0.40
codegen_flags: <defaults>
</compile_context>

<pallas_src>
import functools

import jax
import jax.numpy as jnp
from jax.experimental import pallas as pl
from jax.experimental.pallas import tpu as pltpu


# =====================================================================
# Fused Pallas kernel: biLSTM final states + concat(word_emb) + projection
# =====================================================================

def _fused_embedder_kernel(chars_ref, wemb_ref, wx_ref, whh_ref, bg_ref,
                           wpw_ref, wpc_ref, bp_ref, o_ref, *, N, T, H):
    """Layouts (all f32, all resident in VMEM, grid-less single invocation):
      chars_ref : (T*N, D)   time-major char embeddings (row t*N + n = token n, time t)
      wemb_ref  : (N, word_dim)
      wx_ref    : (D, 8H)    input->gates, gate-major columns [i_f i_b|f_f f_b|g_f g_b|o_f o_b]
      whh_ref   : (2H, 8H)   block-diagonal hidden->gates for the fused [h_f|h_b] state
      bg_ref    : (1, 8H)    summed LSTM biases, same column packing
      wpw_ref   : (word_dim, P), wpc_ref : (2H, P), bp_ref : (1, P)   projection split
      o_ref     : (N, P)
    """
    H2 = 2 * H
    G = 8 * H                     # 128 lanes when H == 16

    # (1) Hoisted input projection: one matmul covers all timesteps and both
    #     directions; bias folded in.  Nothing x-dependent remains in the loop.
    gx_all = (jnp.dot(chars_ref[...], wx_ref[...],
                      preferred_element_type=jnp.float32)
              + bg_ref[...])                                   # (T*N, 8H)

    # Static lane masks.  Gate-major packing => forward-direction columns are the
    # first H lanes of every 2H gate block; the g-gate (tanh) block is [4H, 6H).
    lane = jax.lax.broadcasted_iota(jnp.int32, (N, G), 1)
    fwd_mask = (lane % H2) < H
    tanh_mask = (lane >= 2 * H2) & (lane < 3 * H2)

    whh = whh_ref[...]

    # (2) Recurrence: h/c carried as plain values (vregs), no VMEM scratch stores.
    h = jnp.zeros((N, H2), jnp.float32)                        # [h_fwd | h_bwd]
    c = jnp.zeros((N, H2), jnp.float32)

    for t in range(T):   # T is small & static -> fully unrolled for the scheduler
        # Forward consumes time t, backward consumes time T-1-t; merge the two
        # precomputed x-gate slabs with one whole-vreg select.
        gx_f = gx_all[t * N:(t + 1) * N, :]
        gx_b = gx_all[(T - 1 - t) * N:(T - t) * N, :]
        gx = jnp.where(fwd_mask, gx_f, gx_b)

        # One 128-lane-output MXU push per step (both directions fused).
        gates = jnp.dot(h, whh, preferred_element_type=jnp.float32) + gx

        # Whole-vreg nonlinearity, then extract gates at 32-lane boundaries.
        act = jnp.where(tanh_mask, jnp.tanh(gates), jax.nn.sigmoid(gates))
        i_g = act[:, 0 * H2:1 * H2]
        f_g = act[:, 1 * H2:2 * H2]
        g_g = act[:, 2 * H2:3 * H2]
        o_g = act[:, 3 * H2:4 * H2]

        c = f_g * c + i_g * g_g
        h = o_g * jnp.tanh(c)

    # (3) Fused epilogue: projection(cat([word_emb, h_f, h_b])) as a split matmul;
    #     single store region at the very end.
    out = (jnp.dot(wemb_ref[...], wpw_ref[...], preferred_element_type=jnp.float32)
           + jnp.dot(h, wpc_ref[...], preferred_element_type=jnp.float32)
           + bp_ref[...])
    o_ref[...] = out.astype(o_ref.dtype)


def fused_token_embedder(chars_emb_tm, word_emb, wx, whh, b_gates,
                         wp_word, wp_char, b_proj, *, N, T, H):
    P = wp_word.shape[1]
    vmem = pl.BlockSpec(memory_space=pltpu.MemorySpace.VMEM)
    # TODO(synk): at realistic B*S (thousands of tokens) add a grid over the token
    # axis (token-tiled BlockSpecs, dimension_semantics=("parallel",)) so v7x's two
    # TensorCores both get work and tiles are re-derived against its 64 MiB VMEM.
    kernel = functools.partial(_fused_embedder_kernel, N=N, T=T, H=H)
    return pl.pallas_call(
        kernel,
        out_shape=jax.ShapeDtypeStruct((N, P), jnp.float32),
        in_specs=[vmem] * 8,
        out_specs=vmem,
    )(chars_emb_tm, word_emb, wx, whh, b_gates, wp_word, wp_char, b_proj)


# =====================================================================
# Parameter init (PyTorch-equivalent shapes) + packing for the fused kernel
# =====================================================================

def init_params(key, word_vocab, word_dim, char_vocab, char_dim, proj_dim):
    keys = jax.random.split(key, 12)
    s = 0.1
    H = char_dim
    D = char_dim
    emb_dim = word_dim + 2 * H
    p = {}
    p['word_emb'] = jax.random.normal(keys[0], (word_vocab, word_dim), jnp.float32) * s
    p['char_emb'] = jax.random.normal(keys[1], (char_vocab, char_dim), jnp.float32) * s

    # nn.LSTM per-direction params: weight_ih (4H, D), weight_hh (4H, H),
    # bias_ih (4H,), bias_hh (4H,); gate order (i, f, g, o).
    def lstm_dir(k0, k1, k2, k3):
        w_ih = jax.random.normal(k0, (4 * H, D), jnp.float32) * s
        w_hh = jax.random.normal(k1, (4 * H, H), jnp.float32) * s
        b_ih = jax.random.normal(k2, (4 * H,), jnp.float32) * s
        b_hh = jax.random.normal(k3, (4 * H,), jnp.float32) * s
        return w_ih, w_hh, b_ih + b_hh

    wih_f, whh_f, b_f = lstm_dir(*keys[2:6])
    wih_b, whh_b, b_b = lstm_dir(*keys[6:10])

    # ----- pack for the fused kernel -----
    # Column layout (8H = 128 lanes at H=16): [ i_f i_b | f_f f_b | g_f g_b | o_f o_b ]
    wx = jnp.zeros((D, 8 * H), jnp.float32)
    whh = jnp.zeros((2 * H, 8 * H), jnp.float32)   # block-diagonal over directions
    bg = jnp.zeros((1, 8 * H), jnp.float32)
    for k in range(4):                             # PyTorch gate order: i, f, g, o
        cf = slice(k * 2 * H, k * 2 * H + H)       # forward columns of gate k
        cb = slice(k * 2 * H + H, (k + 1) * 2 * H) # backward columns of gate k
        rg = slice(k * H, (k + 1) * H)             # rows of gate k in torch layout
        wx = wx.at[:, cf].set(wih_f[rg, :].T)
        wx = wx.at[:, cb].set(wih_b[rg, :].T)
        whh = whh.at[:H, cf].set(whh_f[rg, :].T)
        whh = whh.at[H:, cb].set(whh_b[rg, :].T)
        bg = bg.at[0, cf].set(b_f[rg])
        bg = bg.at[0, cb].set(b_b[rg])
    p['wx'], p['whh'], p['b_gates'] = wx, whh, bg

    # nn.Linear(emb_dim, proj_dim): weight (proj_dim, emb_dim), bias (proj_dim,)
    w_proj = jax.random.normal(keys[10], (proj_dim, emb_dim), jnp.float32) * s
    b_proj = jax.random.normal(keys[11], (proj_dim,), jnp.float32) * s
    p['wp_word'] = w_proj.T[:word_dim, :]          # maps word_emb part
    p['wp_char'] = w_proj.T[word_dim:, :]          # maps [h_f | h_b] part
    p['b_proj'] = b_proj[None, :]

    # raw params kept only for the pure-JAX reference check in __main__
    p['_raw'] = dict(wih_f=wih_f, whh_f=whh_f, b_f=b_f,
                     wih_b=wih_b, whh_b=whh_b, b_b=b_b,
                     w_proj=w_proj, b_proj=b_proj)
    return p


# =====================================================================
# Forward (mirrors LstmTokenEmbedder.forward)
# =====================================================================

def lstm_token_embedder_forward(params, word_inp, chars_inp, shape, char_dim):
    B, S = shape
    N = B * S
    T = chars_inp.shape[-1]
    H = char_dim

    # Embedding gathers: plain-JAX glue (no clean/beneficial Pallas equivalent here).
    word_emb = jnp.take(params['word_emb'], word_inp.reshape(N), axis=0)       # (N, word_dim)
    # Gather chars directly in TIME-MAJOR order: transpose the tiny int32 index
    # matrix (not the embedded f32 activations), so no extra HBM pass / HLO transpose.
    chars_idx_tm = jnp.transpose(chars_inp.reshape(N, T), (1, 0)).reshape(T * N)
    chars_emb_tm = jnp.take(params['char_emb'], chars_idx_tm, axis=0)          # (T*N, char_dim)

    out = fused_token_embedder(chars_emb_tm, word_emb,
                               params['wx'], params['whh'], params['b_gates'],
                               params['wp_word'], params['wp_char'], params['b_proj'],
                               N=N, T=T, H=H)
    return out.reshape(B, S, -1)                                               # (B, S, proj_dim)


# Pure-JAX reference (PyTorch-faithful math) used only for the self-check.
def reference_forward(params, word_inp, chars_inp, shape, char_dim):
    raw = params['_raw']
    B, S = shape
    N = B * S
    T = chars_inp.shape[-1]
    H = char_dim

    word_emb = jnp.take(params['word_emb'], word_inp.reshape(N), axis=0)
    x = jnp.take(params['char_emb'], chars_inp.reshape(N, T), axis=0)          # (N, T, D)

    def run_dir(xs, w_ih, w_hh, b):
        h = jnp.zeros((N, H), jnp.float32)
        c = jnp.zeros((N, H), jnp.float32)
        for t in range(xs.shape[1]):
            g = xs[:, t, :] @ w_ih.T + h @ w_hh.T + b
            i_g = jax.nn.sigmoid(g[:, 0 * H:1 * H])
            f_g = jax.nn.sigmoid(g[:, 1 * H:2 * H])
            g_g = jnp.tanh(g[:, 2 * H:3 * H])
            o_g = jax.nn.sigmoid(g[:, 3 * H:4 * H])
            c = f_g * c + i_g * g_g
            h = o_g * jnp.tanh(c)
        return h

    hf = run_dir(x, raw['wih_f'], raw['whh_f'], raw['b_f'])
    hb = run_dir(x[:, ::-1, :], raw['wih_b'], raw['whh_b'], raw['b_b'])
    tok = jnp.concatenate([word_emb, hf, hb], axis=-1)
    out = tok @ raw['w_proj'].T + raw['b_proj'][None, :]
    return out.reshape(B, S, -1)


if __name__ == "__main__":
    # Small, config-consistent shapes:
    #   batch=2, seq_len=8, max_chars_per_token=7,
    #   word_dim=32, char_dim=16 (-> emb_dim=64, 8H=128 gate lanes), projection_dim=32.
    B, S, T = 2, 8, 7
    word_vocab, char_vocab = 100, 60
    word_dim, char_dim, proj_dim = 32, 16, 32

    key = jax.random.PRNGKey(0)
    kp, kw, kc = jax.random.split(key, 3)
    params = init_params(kp, word_vocab, word_dim, char_vocab, char_dim, proj_dim)
    word_inp = jax.random.randint(kw, (B, S), 0, word_vocab, dtype=jnp.int32)
    chars_inp = jax.random.randint(kc, (B, S, T), 0, char_vocab, dtype=jnp.int32)

    out = lstm_token_embedder_forward(params, word_inp, chars_inp, (B, S), char_dim)
    out = jax.block_until_ready(out)
    assert out.shape == (B, S, proj_dim), out.shape
    assert bool(jnp.all(jnp.isfinite(out)))

    ref = reference_forward(params, word_inp, chars_inp, (B, S), char_dim)
    ref = jax.block_until_ready(ref)
    assert bool(jnp.allclose(out, ref, atol=5e-3, rtol=5e-3)), \
        float(jnp.max(jnp.abs(out - ref)))

    print("KERNEL_OK")
</pallas_src>

<mosaic_0001>
module attributes {stable_mosaic.version = 11 : i64} {
  func.func @_fused_embedder_kernel(%arg0: memref<112x16xf32, #tpu.memory_space<vmem>>, %arg1: memref<16x32xf32, #tpu.memory_space<vmem>>, %arg2: memref<16x128xf32, #tpu.memory_space<vmem>>, %arg3: memref<32x128xf32, #tpu.memory_space<vmem>>, %arg4: memref<1x128xf32, #tpu.memory_space<vmem>>, %arg5: memref<32x32xf32, #tpu.memory_space<vmem>>, %arg6: memref<32x32xf32, #tpu.memory_space<vmem>>, %arg7: memref<1x32xf32, #tpu.memory_space<vmem>>, %arg8: memref<16x32xf32, #tpu.memory_space<vmem>>) attributes {dimension_semantics = [], scalar_prefetch = 0 : i64, scratch_operands = 0 : i64, tpu.core_type = #tpu.core_type<tc>} {
    %c0 = arith.constant 0 : index
    %c0_0 = arith.constant 0 : index
    %0 = vector.load %arg0[%c0, %c0_0] : memref<112x16xf32, #tpu.memory_space<vmem>>, vector<112x16xf32>
    %c0_1 = arith.constant 0 : index
    %c0_2 = arith.constant 0 : index
    %1 = vector.load %arg2[%c0_1, %c0_2] : memref<16x128xf32, #tpu.memory_space<vmem>>, vector<16x128xf32>
    %cst = arith.constant dense<0.000000e+00> : vector<112x128xf32>
    %2 = tpu.matmul %0, %1, %cst {dimension_numbers = #tpu.dot_dimension_numbers<[1], [0], [0], [1], [0, 0, 1, 1], [], []>} : vector<112x16xf32>, vector<16x128xf32>, vector<112x128xf32> -> vector<112x128xf32>
    %c0_3 = arith.constant 0 : index
    %c0_4 = arith.constant 0 : index
    %3 = vector.load %arg4[%c0_3, %c0_4] : memref<1x128xf32, #tpu.memory_space<vmem>>, vector<1x128xf32>
    %4 = vector.broadcast %3 : vector<1x128xf32> to vector<112x128xf32>
    %5 = arith.addf %2, %4 : vector<112x128xf32>
    %6 = tpu.iota {dimensions = array<i32: 1>} : vector<16x128xi32>
    %c32_i32 = arith.constant 32 : i32
    %c0_i32 = arith.constant 0 : i32
    %7 = arith.cmpi eq, %c32_i32, %c0_i32 : i32
    %c1_i32 = arith.constant 1 : i32
    %8 = arith.select %7, %c1_i32, %c32_i32 : i32
    %9 = vector.broadcast %8 : i32 to vector<16x128xi32>
    %10 = arith.remsi %6, %9 : vector<16x128xi32>
    %c0_i32_5 = arith.constant 0 : i32
    %11 = vector.broadcast %c0_i32_5 : i32 to vector<16x128xi32>
    %12 = arith.cmpi ne, %10, %11 : vector<16x128xi32>
    %c0_i32_6 = arith.constant 0 : i32
    %13 = vector.broadcast %c0_i32_6 : i32 to vector<16x128xi32>
    %14 = arith.cmpi slt, %10, %13 : vector<16x128xi32>
    %c0_i32_7 = arith.constant 0 : i32
    %15 = arith.cmpi slt, %8, %c0_i32_7 : i32
    %16 = vector.broadcast %15 : i1 to vector<16x128xi1>
    %17 = vector.broadcast %16 : vector<16x128xi1> to vector<16x128xi1>
    %18 = arith.xori %14, %17 : vector<16x128xi1>
    %19 = arith.andi %18, %12 : vector<16x128xi1>
    %20 = vector.broadcast %8 : i32 to vector<16x128xi32>
    %21 = arith.addi %10, %20 : vector<16x128xi32>
    %22 = arith.select %19, %21, %10 : vector<16x128xi1>, vector<16x128xi32>
    %c16_i32 = arith.constant 16 : i32
    %23 = vector.broadcast %c16_i32 : i32 to vector<16x128xi32>
    %24 = arith.cmpi slt, %22, %23 : vector<16x128xi32>
    %c64_i32 = arith.constant 64 : i32
    %25 = vector.broadcast %c64_i32 : i32 to vector<16x128xi32>
    %26 = arith.cmpi sge, %6, %25 : vector<16x128xi32>
    %c96_i32 = arith.constant 96 : i32
    %27 = vector.broadcast %c96_i32 : i32 to vector<16x128xi32>
    %28 = arith.cmpi slt, %6, %27 : vector<16x128xi32>
    %29 = arith.andi %26, %28 : vector<16x128xi1>
    %c0_8 = arith.constant 0 : index
    %c0_9 = arith.constant 0 : index
    %30 = vector.load %arg3[%c0_8, %c0_9] : memref<32x128xf32, #tpu.memory_space<vmem>>, vector<32x128xf32>
    %cst_10 = arith.constant 0.000000e+00 : f32
    %31 = vector.broadcast %cst_10 : f32 to vector<16x32xf32>
    %cst_11 = arith.constant 0.000000e+00 : f32
    %32 = vector.broadcast %cst_11 : f32 to vector<16x32xf32>
    %33 = vector.extract_strided_slice %5 {offsets = [0, 0], sizes = [16, 128], strides = [1, 1]} : vector<112x128xf32> to vector<16x128xf32>
    %34 = vector.extract_strided_slice %5 {offsets = [96, 0], sizes = [16, 128], strides = [1, 1]} : vector<112x128xf32> to vector<16x128xf32>
    %35 = arith.select %24, %33, %34 : vector<16x128xi1>, vector<16x128xf32>
    %cst_12 = arith.constant dense<0.000000e+00> : vector<16x128xf32>
    %36 = tpu.matmul %31, %30, %cst_12 {dimension_numbers = #tpu.dot_dimension_numbers<[1], [0], [0], [1], [0, 0, 1, 1], [], []>} : vector<16x32xf32>, vector<32x128xf32>, vector<16x128xf32> -> vector<16x128xf32>
    %37 = arith.addf %36, %35 : vector<16x128xf32>
    %38 = math.tanh %37 : vector<16x128xf32>
    %39 = arith.negf %37 : vector<16x128xf32>
    %40 = math.exp %39 : vector<16x128xf32>
    %cst_13 = arith.constant 1.000000e+00 : f32
    %41 = vector.broadcast %cst_13 : f32 to vector<16x128xf32>
    %42 = arith.addf %41, %40 : vector<16x128xf32>
    %43 = arith.divf %41, %42 : vector<16x128xf32>
    %44 = arith.select %29, %38, %43 : vector<16x128xi1>, vector<16x128xf32>
    %45 = vector.extract_strided_slice %44 {offsets = [0, 0], sizes = [16, 32], strides = [1, 1]} : vector<16x128xf32> to vector<16x32xf32>
    %46 = vector.extract_strided_slice %44 {offsets = [0, 32], sizes = [16, 32], strides = [1, 1]} : vector<16x128xf32> to vector<16x32xf32>
    %47 = vector.extract_strided_slice %44 {offsets = [0, 64], sizes = [16, 32], strides = [1, 1]} : vector<16x128xf32> to vector<16x32xf32>
    %48 = vector.extract_strided_slice %44 {offsets = [0, 96], sizes = [16, 32], strides = [1, 1]} : vector<16x128xf32> to vector<16x32xf32>
    %49 = arith.mulf %46, %32 : vector<16x32xf32>
    %50 = arith.mulf %45, %47 : vector<16x32xf32>
    %51 = arith.addf %49, %50 : vector<16x32xf32>
    %52 = math.tanh %51 : vector<16x32xf32>
    %53 = arith.mulf %48, %52 : vector<16x32xf32>
    %54 = vector.extract_strided_slice %5 {offsets = [16, 0], sizes = [16, 128], strides = [1, 1]} : vector<112x128xf32> to vector<16x128xf32>
    %55 = vector.extract_strided_slice %5 {offsets = [80, 0], sizes = [16, 128], strides = [1, 1]} : vector<112x128xf32> to vector<16x128xf32>
    %56 = arith.select %24, %54, %55 : vector<16x128xi1>, vector<16x128xf32>
    %cst_14 = arith.constant dense<0.000000e+00> : vector<16x128xf32>
    %57 = tpu.matmul %53, %30, %cst_14 {dimension_numbers = #tpu.dot_dimension_numbers<[1], [0], [0], [1], [0, 0, 1, 1], [], []>} : vector<16x32xf32>, vector<32x128xf32>, vector<16x128xf32> -> vector<16x128xf32>
    %58 = arith.addf %57, %56 : vector<16x128xf32>
    %59 = math.tanh %58 : vector<16x128xf32>
    %60 = arith.negf %58 : vector<16x128xf32>
    %61 = math.exp %60 : vector<16x128xf32>
    %cst_15 = arith.constant 1.000000e+00 : f32
    %62 = vector.broadcast %cst_15 : f32 to vector<16x128xf32>
    %63 = arith.addf %62, %61 : vector<16x128xf32>
    %64 = arith.divf %62, %63 : vector<16x128xf32>
    %65 = arith.select %29, %59, %64 : vector<16x128xi1>, vector<16x128xf32>
    %66 = vector.extract_strided_slice %65 {offsets = [0, 0], sizes = [16, 32], strides = [1, 1]} : vector<16x128xf32> to vector<16x32xf32>
    %67 = vector.extract_strided_slice %65 {offsets = [0, 32], sizes = [16, 32], strides = [1, 1]} : vector<16x128xf32> to vector<16x32xf32>
    %68 = vector.extract_strided_slice %65 {offsets = [0, 64], sizes = [16, 32], strides = [1, 1]} : vector<16x128xf32> to vector<16x32xf32>
    %69 = vector.extract_strided_slice %65 {offsets = [0, 96], sizes = [16, 32], strides = [1, 1]} : vector<16x128xf32> to vector<16x32xf32>
    %70 = arith.mulf %67, %51 : vector<16x32xf32>
    %71 = arith.mulf %66, %68 : vector<16x32xf32>
    %72 = arith.addf %70, %71 : vector<16x32xf32>
    %73 = math.tanh %72 : vector<16x32xf32>
    %74 = arith.mulf %69, %73 : vector<16x32xf32>
    %75 = vector.extract_strided_slice %5 {offsets = [32, 0], sizes = [16, 128], strides = [1, 1]} : vector<112x128xf32> to vector<16x128xf32>
    %76 = vector.extract_strided_slice %5 {offsets = [64, 0], sizes = [16, 128], strides = [1, 1]} : vector<112x128xf32> to vector<16x128xf32>
    %77 = arith.select %24, %75, %76 : vector<16x128xi1>, vector<16x128xf32>
    %cst_16 = arith.constant dense<0.000000e+00> : vector<16x128xf32>
    %78 = tpu.matmul %74, %30, %cst_16 {dimension_numbers = #tpu.dot_dimension_numbers<[1], [0], [0], [1], [0, 0, 1, 1], [], []>} : vector<16x32xf32>, vector<32x128xf32>, vector<16x128xf32> -> vector<16x128xf32>
    %79 = arith.addf %78, %77 : vector<16x128xf32>
    %80 = math.tanh %79 : vector<16x128xf32>
    %81 = arith.negf %79 : vector<16x128xf32>
    %82 = math.exp %81 : vector<16x128xf32>
    %cst_17 = arith.constant 1.000000e+00 : f32
    %83 = vector.broadcast %cst_17 : f32 to vector<16x128xf32>
    %84 = arith.addf %83, %82 : vector<16x128xf32>
    %85 = arith.divf %83, %84 : vector<16x128xf32>
    %86 = arith.select %29, %80, %85 : vector<16x128xi1>, vector<16x128xf32>
    %87 = vector.extract_strided_slice %86 {offsets = [0, 0], sizes = [16, 32], strides = [1, 1]} : vector<16x128xf32> to vector<16x32xf32>
    %88 = vector.extract_strided_slice %86 {offsets = [0, 32], sizes = [16, 32], strides = [1, 1]} : vector<16x128xf32> to vector<16x32xf32>
    %89 = vector.extract_strided_slice %86 {offsets = [0, 64], sizes = [16, 32], strides = [1, 1]} : vector<16x128xf32> to vector<16x32xf32>
    %90 = vector.extract_strided_slice %86 {offsets = [0, 96], sizes = [16, 32], strides = [1, 1]} : vector<16x128xf32> to vector<16x32xf32>
    %91 = arith.mulf %88, %72 : vector<16x32xf32>
    %92 = arith.mulf %87, %89 : vector<16x32xf32>
    %93 = arith.addf %91, %92 : vector<16x32xf32>
    %94 = math.tanh %93 : vector<16x32xf32>
    %95 = arith.mulf %90, %94 : vector<16x32xf32>
    %96 = vector.extract_strided_slice %5 {offsets = [48, 0], sizes = [16, 128], strides = [1, 1]} : vector<112x128xf32> to vector<16x128xf32>
    %97 = vector.extract_strided_slice %5 {offsets = [48, 0], sizes = [16, 128], strides = [1, 1]} : vector<112x128xf32> to vector<16x128xf32>
    %98 = arith.select %24, %96, %97 : vector<16x128xi1>, vector<16x128xf32>
    %cst_18 = arith.constant dense<0.000000e+00> : vector<16x128xf32>
    %99 = tpu.matmul %95, %30, %cst_18 {dimension_numbers = #tpu.dot_dimension_numbers<[1], [0], [0], [1], [0, 0, 1, 1], [], []>} : vector<16x32xf32>, vector<32x128xf32>, vector<16x128xf32> -> vector<16x128xf32>
    %100 = arith.addf %99, %98 : vector<16x128xf32>
    %101 = math.tanh %100 : vector<16x128xf32>
    %102 = arith.negf %100 : vector<16x128xf32>
    %103 = math.exp %102 : vector<16x128xf32>
    %cst_19 = arith.constant 1.000000e+00 : f32
    %104 = vector.broadcast %cst_19 : f32 to vector<16x128xf32>
    %105 = arith.addf %104, %103 : vector<16x128xf32>
    %106 = arith.divf %104, %105 : vector<16x128xf32>
    %107 = arith.select %29, %101, %106 : vector<16x128xi1>, vector<16x128xf32>
    %108 = vector.extract_strided_slice %107 {offsets = [0, 0], sizes = [16, 32], strides = [1, 1]} : vector<16x128xf32> to vector<16x32xf32>
    %109 = vector.extract_strided_slice %107 {offsets = [0, 32], sizes = [16, 32], strides = [1, 1]} : vector<16x128xf32> to vector<16x32xf32>
    %110 = vector.extract_strided_slice %107 {offsets = [0, 64], sizes = [16, 32], strides = [1, 1]} : vector<16x128xf32> to vector<16x32xf32>
    %111 = vector.extract_strided_slice %107 {offsets = [0, 96], sizes = [16, 32], strides = [1, 1]} : vector<16x128xf32> to vector<16x32xf32>
    %112 = arith.mulf %109, %93 : vector<16x32xf32>
    %113 = arith.mulf %108, %110 : vector<16x32xf32>
    %114 = arith.addf %112, %113 : vector<16x32xf32>
    %115 = math.tanh %114 : vector<16x32xf32>
    %116 = arith.mulf %111, %115 : vector<16x32xf32>
    %117 = vector.extract_strided_slice %5 {offsets = [64, 0], sizes = [16, 128], strides = [1, 1]} : vector<112x128xf32> to vector<16x128xf32>
    %118 = vector.extract_strided_slice %5 {offsets = [32, 0], sizes = [16, 128], strides = [1, 1]} : vector<112x128xf32> to vector<16x128xf32>
    %119 = arith.select %24, %117, %118 : vector<16x128xi1>, vector<16x128xf32>
    %cst_20 = arith.constant dense<0.000000e+00> : vector<16x128xf32>
    %120 = tpu.matmul %116, %30, %cst_20 {dimension_numbers = #tpu.dot_dimension_numbers<[1], [0], [0], [1], [0, 0, 1, 1], [], []>} : vector<16x32xf32>, vector<32x128xf32>, vector<16x128xf32> -> vector<16x128xf32>
    %121 = arith.addf %120, %119 : vector<16x128xf32>
    %122 = math.tanh %121 : vector<16x128xf32>
    %123 = arith.negf %121 : vector<16x128xf32>
    %124 = math.exp %123 : vector<16x128xf32>
    %cst_21 = arith.constant 1.000000e+00 : f32
    %125 = vector.broadcast %cst_21 : f32 to vector<16x128xf32>
    %126 = arith.addf %125, %124 : vector<16x128xf32>
    %127 = arith.divf %125, %126 : vector<16x128xf32>
    %128 = arith.select %29, %122, %127 : vector<16x128xi1>, vector<16x128xf32>
    %129 = vector.extract_strided_slice %128 {offsets = [0, 0], sizes = [16, 32], strides = [1, 1]} : vector<16x128xf32> to vector<16x32xf32>
    %130 = vector.extract_strided_slice %128 {offsets = [0, 32], sizes = [16, 32], strides = [1, 1]} : vector<16x128xf32> to vector<16x32xf32>
    %131 = vector.extract_strided_slice %128 {offsets = [0, 64], sizes = [16, 32], strides = [1, 1]} : vector<16x128xf32> to vector<16x32xf32>
    %132 = vector.extract_strided_slice %128 {offsets = [0, 96], sizes = [16, 32], strides = [1, 1]} : vector<16x128xf32> to vector<16x32xf32>
    %133 = arith.mulf %130, %114 : vector<16x32xf32>
    %134 = arith.mulf %129, %131 : vector<16x32xf32>
    %135 = arith.addf %133, %134 : vector<16x32xf32>
    %136 = math.tanh %135 : vector<16x32xf32>
    %137 = arith.mulf %132, %136 : vector<16x32xf32>
    %138 = vector.extract_strided_slice %5 {offsets = [80, 0], sizes = [16, 128], strides = [1, 1]} : vector<112x128xf32> to vector<16x128xf32>
    %139 = vector.extract_strided_slice %5 {offsets = [16, 0], sizes = [16, 128], strides = [1, 1]} : vector<112x128xf32> to vector<16x128xf32>
    %140 = arith.select %24, %138, %139 : vector<16x128xi1>, vector<16x128xf32>
    %cst_22 = arith.constant dense<0.000000e+00> : vector<16x128xf32>
    %141 = tpu.matmul %137, %30, %cst_22 {dimension_numbers = #tpu.dot_dimension_numbers<[1], [0], [0], [1], [0, 0, 1, 1], [], []>} : vector<16x32xf32>, vector<32x128xf32>, vector<16x128xf32> -> vector<16x128xf32>
    %142 = arith.addf %141, %140 : vector<16x128xf32>
    %143 = math.tanh %142 : vector<16x128xf32>
    %144 = arith.negf %142 : vector<16x128xf32>
    %145 = math.exp %144 : vector<16x128xf32>
    %cst_23 = arith.constant 1.000000e+00 : f32
    %146 = vector.broadcast %cst_23 : f32 to vector<16x128xf32>
    %147 = arith.addf %146, %145 : vector<16x128xf32>
    %148 = arith.divf %146, %147 : vector<16x128xf32>
    %149 = arith.select %29, %143, %148 : vector<16x128xi1>, vector<16x128xf32>
    %150 = vector.extract_strided_slice %149 {offsets = [0, 0], sizes = [16, 32], strides = [1, 1]} : vector<16x128xf32> to vector<16x32xf32>
    %151 = vector.extract_strided_slice %149 {offsets = [0, 32], sizes = [16, 32], strides = [1, 1]} : vector<16x128xf32> to vector<16x32xf32>
    %152 = vector.extract_strided_slice %149 {offsets = [0, 64], sizes = [16, 32], strides = [1, 1]} : vector<16x128xf32> to vector<16x32xf32>
    %153 = vector.extract_strided_slice %149 {offsets = [0, 96], sizes = [16, 32], strides = [1, 1]} : vector<16x128xf32> to vector<16x32xf32>
    %154 = arith.mulf %151, %135 : vector<16x32xf32>
    %155 = arith.mulf %150, %152 : vector<16x32xf32>
    %156 = arith.addf %154, %155 : vector<16x32xf32>
    %157 = math.tanh %156 : vector<16x32xf32>
    %158 = arith.mulf %153, %157 : vector<16x32xf32>
    %159 = vector.extract_strided_slice %5 {offsets = [96, 0], sizes = [16, 128], strides = [1, 1]} : vector<112x128xf32> to vector<16x128xf32>
    %160 = vector.extract_strided_slice %5 {offsets = [0, 0], sizes = [16, 128], strides = [1, 1]} : vector<112x128xf32> to vector<16x128xf32>
    %161 = arith.select %24, %159, %160 : vector<16x128xi1>, vector<16x128xf32>
    %cst_24 = arith.constant dense<0.000000e+00> : vector<16x128xf32>
    %162 = tpu.matmul %158, %30, %cst_24 {dimension_numbers = #tpu.dot_dimension_numbers<[1], [0], [0], [1], [0, 0, 1, 1], [], []>} : vector<16x32xf32>, vector<32x128xf32>, vector<16x128xf32> -> vector<16x128xf32>
    %163 = arith.addf %162, %161 : vector<16x128xf32>
    %164 = math.tanh %163 : vector<16x128xf32>
    %165 = arith.negf %163 : vector<16x128xf32>
    %166 = math.exp %165 : vector<16x128xf32>
    %cst_25 = arith.constant 1.000000e+00 : f32
    %167 = vector.broadcast %cst_25 : f32 to vector<16x128xf32>
    %168 = arith.addf %167, %166 : vector<16x128xf32>
    %169 = arith.divf %167, %168 : vector<16x128xf32>
    %170 = arith.select %29, %164, %169 : vector<16x128xi1>, vector<16x128xf32>
    %171 = vector.extract_strided_slice %170 {offsets = [0, 0], sizes = [16, 32], strides = [1, 1]} : vector<16x128xf32> to vector<16x32xf32>
    %172 = vector.extract_strided_slice %170 {offsets = [0, 32], sizes = [16, 32], strides = [1, 1]} : vector<16x128xf32> to vector<16x32xf32>
    %173 = vector.extract_strided_slice %170 {offsets = [0, 64], sizes = [16, 32], strides = [1, 1]} : vector<16x128xf32> to vector<16x32xf32>
    %174 = vector.extract_strided_slice %170 {offsets = [0, 96], sizes = [16, 32], strides = [1, 1]} : vector<16x128xf32> to vector<16x32xf32>
    %175 = arith.mulf %172, %156 : vector<16x32xf32>
    %176 = arith.mulf %171, %173 : vector<16x32xf32>
    %177 = arith.addf %175, %176 : vector<16x32xf32>
    %178 = math.tanh %177 : vector<16x32xf32>
    %179 = arith.mulf %174, %178 : vector<16x32xf32>
    %c0_26 = arith.constant 0 : index
    %c0_27 = arith.constant 0 : index
    %180 = vector.load %arg1[%c0_26, %c0_27] : memref<16x32xf32, #tpu.memory_space<vmem>>, vector<16x32xf32>
    %c0_28 = arith.constant 0 : index
    %c0_29 = arith.constant 0 : index
    %181 = vector.load %arg5[%c0_28, %c0_29] : memref<32x32xf32, #tpu.memory_space<vmem>>, vector<32x32xf32>
    %cst_30 = arith.constant dense<0.000000e+00> : vector<16x32xf32>
    %182 = tpu.matmul %180, %181, %cst_30 {dimension_numbers = #tpu.dot_dimension_numbers<[1], [0], [0], [1], [0, 0, 1, 1], [], []>} : vector<16x32xf32>, vector<32x32xf32>, vector<16x32xf32> -> vector<16x32xf32>
    %c0_31 = arith.constant 0 : index
    %c0_32 = arith.constant 0 : index
    %183 = vector.load %arg6[%c0_31, %c0_32] : memref<32x32xf32, #tpu.memory_space<vmem>>, vector<32x32xf32>
    %cst_33 = arith.constant dense<0.000000e+00> : vector<16x32xf32>
    %184 = tpu.matmul %179, %183, %cst_33 {dimension_numbers = #tpu.dot_dimension_numbers<[1], [0], [0], [1], [0, 0, 1, 1], [], []>} : vector<16x32xf32>, vector<32x32xf32>, vector<16x32xf32> -> vector<16x32xf32>
    %185 = arith.addf %182, %184 : vector<16x32xf32>
    %c0_34 = arith.constant 0 : index
    %c0_35 = arith.constant 0 : index
    %186 = vector.load %arg7[%c0_34, %c0_35] : memref<1x32xf32, #tpu.memory_space<vmem>>, vector<1x32xf32>
    %187 = vector.broadcast %186 : vector<1x32xf32> to vector<16x32xf32>
    %188 = arith.addf %185, %187 : vector<16x32xf32>
    %c0_36 = arith.constant 0 : index
    %c0_37 = arith.constant 0 : index
    %189 = vector.load %arg8[%c0_36, %c0_37] : memref<16x32xf32, #tpu.memory_space<vmem>>, vector<16x32xf32>
    tpu.vector_store %arg8[%c0_36, %c0_37], %188 {strides = array<i32>} : memref<16x32xf32, #tpu.memory_space<vmem>>, vector<16x32xf32>,
    return
  }
}

</mosaic_0001>

<llo_original>
// kernel: tpu_custom_call.1
$region0: #{tpu_custom_call.1}
  #allocation0 [shape = 'u32[]', space=smem, size = 0x4, offset = 0x4, fixed_abs, tag = 'smem constant byte address 0x4 - core index']
  #allocation1 [shape = 'u32[144,128]{1,0:T(1,128)}', space=vmem, size = 0x12000, scoped, tag = 'internal scratch']
  %s0 = inlined_call_operand.vmem [shape: f32[112,16], index: 0, kind: input, shape index: {}]
  %s1 = inlined_call_operand.vmem [shape: f32[16,32], index: 1, kind: input, shape index: {}]
  %s2 = inlined_call_operand.vmem [shape: f32[16,128], index: 2, kind: input, shape index: {}]
  %s3 = inlined_call_operand.vmem [shape: f32[32,128], index: 3, kind: input, shape index: {}]
  %s4 = inlined_call_operand.vmem [shape: f32[1,128], index: 4, kind: input, shape index: {}]
  %s5 = inlined_call_operand.vmem [shape: f32[32,32], index: 5, kind: input, shape index: {}]
  %s6 = inlined_call_operand.vmem [shape: f32[32,32], index: 6, kind: input, shape index: {}]
  %s7 = inlined_call_operand.vmem [shape: f32[1,32], index: 7, kind: input, shape index: {}]
  %s8 = inlined_call_operand.hbm [shape: f32[16,32], index: 8, kind: output, shape index: {}]
  %s9 = sld [smem:[#allocation0]]
  $region42: #{tpu_custom_call.1} parent=0
    _
  %s11 = ssub.s32 1, %s9
  %s12 = scalar_select 0, %s11, %s9
  $region1: #{tpu_custom_call.1} parent=0
    #allocation2 [shape = 'u8[8192]{0}', space=vmem, size = 0x2000, scoped, tag = 'output window, operand 0, single buffered']
    #allocation3 [shape = 's32[1]{0}', space=sflag, size = 0x4, scoped, tag = 'scoped memory for tpu_custom_call.1']
    %13 = vsyncpa [#allocation3], 0
    // Predicated region
    $region2: #{tpu_custom_call.1} parent=1 // pred_check
      _
    $region3: #{tpu_custom_call.1} parent=1 // pred_check_branch
      %15 = sbr.rel (0) target = $region5
    $region4: #{tpu_custom_call.1} parent=1 // pred_region
      _
    $region5: #{tpu_custom_call.1} parent=1 // pred_fallthru
      _
    // Predicated region
    $region6: #{tpu_custom_call.1} parent=1 // pred_check
      _
    $region7: #{tpu_custom_call.1} parent=1 // pred_check_branch
      %17 = sbr.rel (0) target = $region9
    $region8: #{tpu_custom_call.1} parent=1 // pred_region
      _
    $region9: #{tpu_custom_call.1} parent=1 // pred_fallthru
      _
    // Predicated region
    $region10: #{tpu_custom_call.1} parent=1 // pred_check
      _
    $region11: #{tpu_custom_call.1} parent=1 // pred_check_branch
      %19 = sbr.rel (0) target = $region13
    $region12: #{tpu_custom_call.1} parent=1 // pred_region
      _
    $region13: #{tpu_custom_call.1} parent=1 // pred_fallthru
      _
    // Predicated region
    $region14: #{tpu_custom_call.1} parent=1 // pred_check
      _
    $region15: #{tpu_custom_call.1} parent=1 // pred_check_branch
      %21 = sbr.rel (0) target = $region17
    $region16: #{tpu_custom_call.1} parent=1 // pred_region
      _
    $region17: #{tpu_custom_call.1} parent=1 // pred_fallthru
      _
    // Predicated region
    $region18: #{tpu_custom_call.1} parent=1 // pred_check
      _
    $region19: #{tpu_custom_call.1} parent=1 // pred_check_branch
      %23 = sbr.rel (0) target = $region21
    $region20: #{tpu_custom_call.1} parent=1 // pred_region
      _
    $region21: #{tpu_custom_call.1} parent=1 // pred_fallthru
      _
    // Predicated region
    $region22: #{tpu_custom_call.1} parent=1 // pred_check
      _
    $region23: #{tpu_custom_call.1} parent=1 // pred_check_branch
      %25 = sbr.rel (0) target = $region25
    $region24: #{tpu_custom_call.1} parent=1 // pred_region
      _
    $region25: #{tpu_custom_call.1} parent=1 // pred_fallthru
      _
    // Predicated region
    $region26: #{tpu_custom_call.1} parent=1 // pred_check
      _
    $region27: #{tpu_custom_call.1} parent=1 // pred_check_branch
      %27 = sbr.rel (0) target = $region29
    $region28: #{tpu_custom_call.1} parent=1 // pred_region
      _
    $region29: #{tpu_custom_call.1} parent=1 // pred_fallthru
      _
    // Predicated region
    $region30: #{tpu_custom_call.1} parent=1 // pred_check
      _
    $region31: #{tpu_custom_call.1} parent=1 // pred_check_branch
      %29 = sbr.rel (0) target = $region33
    $region32: #{tpu_custom_call.1} parent=1 // pred_region
      _
    $region33: #{tpu_custom_call.1} parent=1 // pred_fallthru
      _
    %v30 = vld [vmem:[%s0] sm:$0xff]
    %v31 = vld [vmem:[%s0 + $0x8] sm:$0xff]
    %v32 = vld [vmem:[%s0 + $0x10] sm:$0xff]
    %v33 = vld [vmem:[%s0 + $0x18] sm:$0xff]
    %v34 = vld [vmem:[%s0 + $0x20] sm:$0xff]
    %v35 = vld [vmem:[%s0 + $0x28] sm:$0xff]
    %v36 = vld [vmem:[%s0 + $0x30] sm:$0xff]
    %v37 = vld [vmem:[%s0 + $0x38] sm:$0xff]
    %v38 = vld [vmem:[%s0 + $0x40] sm:$0xff]
    %v39 = vld [vmem:[%s0 + $0x48] sm:$0xff]
    %v40 = vld [vmem:[%s0 + $0x50] sm:$0xff]
    %v41 = vld [vmem:[%s0 + $0x58] sm:$0xff]
    %v42 = vld [vmem:[%s0 + $0x60] sm:$0xff]
    %v43 = vld [vmem:[%s0 + $0x68] sm:$0xff]
    %v44 = vld [vmem:[%s2] sm:$0xff]
    %v45 = vld [vmem:[%s2 + $0x8] sm:$0xff]
    %v46 = vld [vmem:[%s4] sm:$0x1]
    %v48 = vlaneseq
    %v49 = vshrl.u32 %v48, 7
    %v50 = vsub.s32 0, %v49
    %v51 = vrot.slane %v46, %v50
    %vm53 = vcmask 130048
    %v55 = vsel %vm53, %v30, 0
    %v58 = vsel %vm53, %v31, 0
    %v61 = vsel %vm53, %v32, 0
    %v64 = vsel %vm53, %v33, 0
    %v67 = vsel %vm53, %v34, 0
    %v70 = vsel %vm53, %v35, 0
    %v73 = vsel %vm53, %v36, 0
    %v76 = vsel %vm53, %v37, 0
    %v79 = vsel %vm53, %v38, 0
    %v82 = vsel %vm53, %v39, 0
    %v85 = vsel %vm53, %v40, 0
    %v88 = vsel %vm53, %v41, 0
    %v91 = vsel %vm53, %v42, 0
    %v94 = vsel %vm53, %v43, 0
    %96 = vmatprep.subr.mxu0 0.0
    %97 = vmatpush1.msra.mxu0 %v44
    %98 = vmatprep.subr.mxu0 0.0
    %99 = vmatpush1.msra.mxu0 %v45
    %100 = vmatprep.subr.mxu0 0.0
    %101 = vmatpush1.msra.mxu0 0.0
    %102 = vmatprep.subr.mxu0 0.0
    %103 = vmatpush1.msra.mxu0 0.0
    %104 = vmatprep.subr.mxu0 0.0
    %105 = vmatpush1.msra.mxu0 0.0
    %106 = vmatprep.subr.mxu0 0.0
    %107 = vmatpush1.msra.mxu0 0.0
    %108 = vmatprep.subr.mxu0 0.0
    %109 = vmatpush1.msra.mxu0 0.0
    %110 = vmatprep.subr.mxu0 0.0
    %111 = vmatpush1.msra.mxu0 0.0
    %112 = vmatprep.subr.mxu0 0.0
    %113 = vmatpush1.msra.mxu0 0.0
    %114 = vmatprep.subr.mxu0 0.0
    %115 = vmatpush1.msra.mxu0 0.0
    %116 = vmatprep.subr.mxu0 0.0
    %117 = vmatpush1.msra.mxu0 0.0
    %118 = vmatprep.subr.mxu0 0.0
    %119 = vmatpush1.msra.mxu0 0.0
    %120 = vmatprep.subr.mxu0 0.0
    %121 = vmatpush1.msra.mxu0 0.0
    %122 = vmatprep.subr.mxu0 0.0
    %123 = vmatpush1.msra.mxu0 0.0
    %124 = vmatprep.subr.mxu0 0.0
    %125 = vmatpush1.msra.mxu0 0.0
    %126 = vmatprep.subr.mxu0 0.0
    %127 = vmatpush1.msra.mxu0 0.0
    %128 = vmatprep.subr.mxu0 0.0
    %129 = vmatpush1.msra.mxu0 0.0
    %130 = vmatprep.subr.mxu0 0.0
    %131 = vmatpush1.msra.mxu0 0.0
    %132 = vmatprep.subr.mxu0 0.0
    %133 = vmatpush1.msra.mxu0 0.0
    %134 = vmatprep.subr.mxu0 0.0
    %135 = vmatpush1.msra.mxu0 0.0
    %136 = vmatprep.subr.mxu0 0.0
    %137 = vmatpush1.msra.mxu0 0.0
    %138 = vmatprep.subr.mxu0 0.0
    %139 = vmatpush1.msra.mxu0 0.0
    %140 = vmatprep.subr.mxu0 0.0
    %141 = vmatpush1.msra.mxu0 0.0
    %142 = vmatprep.subr.mxu0 0.0
    %143 = vmatpush1.msra.mxu0 0.0
    %144 = vmatprep.subr.mxu0 0.0
    %145 = vmatpush1.msra.mxu0 0.0
    %146 = vmatprep.subr.mxu0 0.0
    %147 = vmatpush1.msra.mxu0 0.0
    %148 = vmatprep.subr.mxu0 0.0
    %149 = vmatpush1.msra.mxu0 0.0
    %150 = vmatprep.subr.mxu0 0.0
    %151 = vmatpush1.msra.mxu0 0.0
    %152 = vmatprep.subr.mxu0 0.0
    %153 = vmatpush1.msra.mxu0 0.0
    %154 = vmatprep.subr.mxu0 0.0
    %155 = vmatpush1.msra.mxu0 0.0
    %156 = vmatprep.subr.mxu0 0.0
    %157 = vmatpush1.msra.mxu0 0.0
    %158 = vmatprep.subr.mxu0 0.0
    %159 = vmatpush1.msra.mxu0 0.0
    %160 = vmatprep.mubr.f32.mxu0 0.0
    %161 = vmatmul.mubr.f32.gmra.mrb[0].mxu0 %v55
    %v162 = vpop.f32.mrb[0].mxu0
    %v163 = vadd.f32 %v51, %v162
    %v164 = vpop.f32.mrb[0].mxu0
    %165 = vmatprep.mubr.f32.mxu0 0.0
    %166 = vmatmul.mubr.f32.gmra.mrb[0].mxu0 %v58
    %v167 = vpop.f32.mrb[0].mxu0
    %v168 = vadd.f32 %v51, %v167
    %v169 = vpop.f32.mrb[0].mxu0
    %170 = vmatprep.mubr.f32.mxu0 0.0
    %171 = vmatmul.mubr.f32.gmra.mrb[0].mxu0 %v61
    %v172 = vpop.f32.mrb[0].mxu0
    %v173 = vadd.f32 %v51, %v172
    %v174 = vpop.f32.mrb[0].mxu0
    %175 = vmatprep.mubr.f32.mxu0 0.0
    %176 = vmatmul.mubr.f32.gmra.mrb[0].mxu0 %v64
    %v177 = vpop.f32.mrb[0].mxu0
    %v178 = vadd.f32 %v51, %v177
    %v179 = vpop.f32.mrb[0].mxu0
    %180 = vmatprep.mubr.f32.mxu0 0.0
    %181 = vmatmul.mubr.f32.gmra.mrb[0].mxu0 %v67
    %v182 = vpop.f32.mrb[0].mxu0
    %v183 = vadd.f32 %v51, %v182
    %v184 = vpop.f32.mrb[0].mxu0
    %185 = vmatprep.mubr.f32.mxu0 0.0
    %186 = vmatmul.mubr.f32.gmra.mrb[0].mxu0 %v70
    %v187 = vpop.f32.mrb[0].mxu0
    %v188 = vadd.f32 %v51, %v187
    %v189 = vpop.f32.mrb[0].mxu0
    %190 = vmatprep.mubr.f32.mxu0 0.0
    %191 = vmatmul.mubr.f32.gmra.mrb[0].mxu0 %v73
    %v192 = vpop.f32.mrb[0].mxu0
    %v193 = vadd.f32 %v51, %v192
    %v194 = vpop.f32.mrb[0].mxu0
    %195 = vmatprep.mubr.f32.mxu0 0.0
    %196 = vmatmul.mubr.f32.gmra.mrb[0].mxu0 %v76
    %v197 = vpop.f32.mrb[0].mxu0
    %v198 = vadd.f32 %v51, %v197
    %v199 = vpop.f32.mrb[0].mxu0
    %200 = vmatprep.mubr.f32.mxu0 0.0
    %201 = vmatmul.mubr.f32.gmra.mrb[0].mxu0 %v79
    %v202 = vpop.f32.mrb[0].mxu0
    %v203 = vadd.f32 %v51, %v202
    %v204 = vpop.f32.mrb[0].mxu0
    %205 = vmatprep.mubr.f32.mxu0 0.0
    %206 = vmatmul.mubr.f32.gmra.mrb[0].mxu0 %v82
    %v207 = vpop.f32.mrb[0].mxu0
    %v208 = vadd.f32 %v51, %v207
    %v209 = vpop.f32.mrb[0].mxu0
    %210 = vmatprep.mubr.f32.mxu0 0.0
    %211 = vmatmul.mubr.f32.gmra.mrb[0].mxu0 %v85
    %v212 = vpop.f32.mrb[0].mxu0
    %v213 = vadd.f32 %v51, %v212
    %v214 = vpop.f32.mrb[0].mxu0
    %215 = vmatprep.mubr.f32.mxu0 0.0
    %216 = vmatmul.mubr.f32.gmra.mrb[0].mxu0 %v88
    %v217 = vpop.f32.mrb[0].mxu0
    %v218 = vadd.f32 %v51, %v217
    %v219 = vpop.f32.mrb[0].mxu0
    %220 = vmatprep.mubr.f32.mxu0 0.0
    %221 = vmatmul.mubr.f32.gmra.mrb[0].mxu0 %v91
    %v222 = vpop.f32.mrb[0].mxu0
    %v223 = vadd.f32 %v51, %v222
    %v224 = vpop.f32.mrb[0].mxu0
    %225 = vmatprep.mubr.f32.mxu0 0.0
    %226 = vmatmul.mubr.f32.gmra.mrb[0].mxu0 %v94
    %v227 = vpop.f32.mrb[0].mxu0
    %v228 = vadd.f32 %v51, %v227
    %v229 = vpop.f32.mrb[0].mxu0
    %230 = vdwg.mxu0
    %v231 = vlaneseq
    %v232 = vand.u32 %v231, 127
    %vm233 = vcmp.lt.s32.totalorder %v232, 0
    %v234 = vsub.s32 0, %v232
    %v235 = vsel %vm233, %v234, %v232
    %v236 = vshrl.u32 %v235, 5
    %v237 = vand.u32 %v235, 31
    %v238 = vsub.s32 0, %v237
    %v239 = vsel %vm233, %v238, %v237
    %vm240 = vcmp.ne.s32.totalorder %v239, 0
    %vm241 = vcmp.lt.s32.totalorder %v239, 0
    %vm242 = vmand %vm241, %vm240
    %v243 = vadd.s32 %v239, 32
    %v244 = vsel %vm242, %v243, %v239
    %vm245 = vcmp.lt.s32.totalorder %v244, 16
    %vm246 = vcmp.ge.s32.totalorder %v232, 64
    %vm247 = vcmp.lt.s32.totalorder %v232, 96
    %vm248 = vmand %vm246, %vm247
    %v249 = vld [vmem:[%s3] sm:$0xff]
    %v250 = vld [vmem:[%s3 + $0x8] sm:$0xff]
    %v251 = vld [vmem:[%s3 + $0x10] sm:$0xff]
    %v252 = vld [vmem:[%s3 + $0x18] sm:$0xff]
    %v253 = vsel %vm245, %v163, %v223
    %v254 = vsel %vm245, %v168, %v228
    %vm255 = vcmask 261120
    %v257 = vsel %vm255, 0.0, 0
    %259 = vmatprep.subr.mxu0 0.0
    %260 = vmatpush1.msra.mxu0 %v249
    %261 = vmatprep.subr.mxu0 0.0
    %262 = vmatpush1.msra.mxu0 %v250
    %263 = vmatprep.subr.mxu0 0.0
    %264 = vmatpush1.msra.mxu0 %v251
    %265 = vmatprep.subr.mxu0 0.0
    %266 = vmatpush1.msra.mxu0 %v252
    %267 = vmatprep.subr.mxu0 0.0
    %268 = vmatpush1.msra.mxu0 0.0
    %269 = vmatprep.subr.mxu0 0.0
    %270 = vmatpush1.msra.mxu0 0.0
    %271 = vmatprep.subr.mxu0 0.0
    %272 = vmatpush1.msra.mxu0 0.0
    %273 = vmatprep.subr.mxu0 0.0
    %274 = vmatpush1.msra.mxu0 0.0
    %275 = vmatprep.subr.mxu0 0.0
    %276 = vmatpush1.msra.mxu0 0.0
    %277 = vmatprep.subr.mxu0 0.0
    %278 = vmatpush1.msra.mxu0 0.0
    %279 = vmatprep.subr.mxu0 0.0
    %280 = vmatpush1.msra.mxu0 0.0
    %281 = vmatprep.subr.mxu0 0.0
    %282 = vmatpush1.msra.mxu0 0.0
    %283 = vmatprep.subr.mxu0 0.0
    %284 = vmatpush1.msra.mxu0 0.0
    %285 = vmatprep.subr.mxu0 0.0
    %286 = vmatpush1.msra.mxu0 0.0
    %287 = vmatprep.subr.mxu0 0.0
    %288 = vmatpush1.msra.mxu0 0.0
    %289 = vmatprep.subr.mxu0 0.0
    %290 = vmatpush1.msra.mxu0 0.0
    %291 = vmatprep.subr.mxu0 0.0
    %292 = vmatpush1.msra.mxu0 0.0
    %293 = vmatprep.subr.mxu0 0.0
    %294 = vmatpush1.msra.mxu0 0.0
    %295 = vmatprep.subr.mxu0 0.0
    %296 = vmatpush1.msra.mxu0 0.0
    %297 = vmatprep.subr.mxu0 0.0
    %298 = vmatpush1.msra.mxu0 0.0
    %299 = vmatprep.subr.mxu0 0.0
    %300 = vmatpush1.msra.mxu0 0.0
    %301 = vmatprep.subr.mxu0 0.0
    %302 = vmatpush1.msra.mxu0 0.0
    %303 = vmatprep.subr.mxu0 0.0
    %304 = vmatpush1.msra.mxu0 0.0
    %305 = vmatprep.subr.mxu0 0.0
    %306 = vmatpush1.msra.mxu0 0.0
    %307 = vmatprep.subr.mxu0 0.0
    %308 = vmatpush1.msra.mxu0 0.0
    %309 = vmatprep.subr.mxu0 0.0
    %310 = vmatpush1.msra.mxu0 0.0
    %311 = vmatprep.subr.mxu0 0.0
    %312 = vmatpush1.msra.mxu0 0.0
    %313 = vmatprep.subr.mxu0 0.0
    %314 = vmatpush1.msra.mxu0 0.0
    %315 = vmatprep.subr.mxu0 0.0
    %316 = vmatpush1.msra.mxu0 0.0
    %317 = vmatprep.subr.mxu0 0.0
    %318 = vmatpush1.msra.mxu0 0.0
    %319 = vmatprep.subr.mxu0 0.0
    %320 = vmatpush1.msra.mxu0 0.0
    %321 = vmatprep.subr.mxu0 0.0
    %322 = vmatpush1.msra.mxu0 0.0
    %323 = vmatprep.mubr.f32.mxu0 0.0
    %324 = vmatmul.mubr.f32.gmra.mrb[0].mxu0 %v257
    %v325 = vpop.f32.mrb[0].mxu0
    %v326 = vadd.f32 %v253, %v325
    %v327 = vpop.f32.mrb[0].mxu0
    %328 = vmatprep.mubr.f32.mxu0 0.0
    %329 = vmatmul.mubr.f32.gmra.mrb[0].mxu0 %v257
    %v330 = vpop.f32.mrb[0].mxu0
    %v331 = vadd.f32 %v254, %v330
    %v332 = vpop.f32.mrb[0].mxu0
    %333 = vdwg.mxu0
    %v334 = vtanh.pop %v326
    %v335 = vtanh.pop %v331
    %v336 = vxor.u32 %v326, 2147483648
    %v337 = vxor.u32 %v331, 2147483648
    %v338 = vmul.f32 %v336, 1.442695
    %v339 = vpow.pop %v338
    %v340 = vmul.f32 %v337, 1.442695
    %v341 = vpow.pop %v340
    %v342 = vadd.f32 %v339, 1.0
    %v343 = vadd.f32 %v341, 1.0
    %v344 = vrcp.pop %v342
    %v345 = vmul.f32 1.0, %v344
    %v346 = vrcp.pop %v343
    %v347 = vmul.f32 1.0, %v346
    %v348 = vsel %vm248, %v334, %v345
    %v349 = vsel %vm248, %v335, %v347
    %v350 = vmul.f32 %v348, 0.0
    %v351 = vmul.f32 %v349, 0.0
    %354 = vrot.lane.b32.xlu0 %v348, 64
    %v355 = vpop.permute.xlu0 %354
    %356 = vrot.lane.b32.xlu0 %v349, 64
    %v357 = vpop.permute.xlu0 %356
    %v360 = vmul.f32 %v348, %v355
    %v361 = vmul.f32 %v349, %v357
    %364 = vrot.lane.b32.xlu0 %v360, 32
    %v365 = vpop.permute.xlu0 %364
    %366 = vrot.lane.b32.xlu0 %v361, 32
    %v367 = vpop.permute.xlu0 %366
    %v370 = vadd.f32 %v350, %v365
    %v371 = vadd.f32 %v351, %v367
    %v372 = vtanh.pop %v370
    %v373 = vtanh.pop %v371
    %376 = vrot.lane.b32.xlu0 %v372, 64
    %v377 = vpop.permute.xlu0 %376
    %378 = vrot.lane.b32.xlu0 %v373, 64
    %v379 = vpop.permute.xlu0 %378
    %v382 = vmul.f32 %v348, %v377
    %v383 = vmul.f32 %v349, %v379
    %v384 = vsel %vm245, %v173, %v213
    %v385 = vsel %vm245, %v178, %v218
    %388 = vrot.lane.b32.xlu0 %v382, 32
    %v389 = vpop.permute.xlu0 %388
    %390 = vrot.lane.b32.xlu0 %v383, 32
    %v391 = vpop.permute.xlu0 %390
    %v392 = vsel %vm255, %v389, 0
    %v394 = vsel %vm255, %v391, 0
    %396 = vmatprep.subr.mxu0 0.0
    %397 = vmatpush1.msra.mxu0 %v249
    %398 = vmatprep.subr.mxu0 0.0
    %399 = vmatpush1.msra.mxu0 %v250
    %400 = vmatprep.subr.mxu0 0.0
    %401 = vmatpush1.msra.mxu0 %v251
    %402 = vmatprep.subr.mxu0 0.0
    %403 = vmatpush1.msra.mxu0 %v252
    %404 = vmatprep.subr.mxu0 0.0
    %405 = vmatpush1.msra.mxu0 0.0
    %406 = vmatprep.subr.mxu0 0.0
    %407 = vmatpush1.msra.mxu0 0.0
    %408 = vmatprep.subr.mxu0 0.0
    %409 = vmatpush1.msra.mxu0 0.0
    %410 = vmatprep.subr.mxu0 0.0
    %411 = vmatpush1.msra.mxu0 0.0
    %412 = vmatprep.subr.mxu0 0.0
    %413 = vmatpush1.msra.mxu0 0.0
    %414 = vmatprep.subr.mxu0 0.0
    %415 = vmatpush1.msra.mxu0 0.0
    %416 = vmatprep.subr.mxu0 0.0
    %417 = vmatpush1.msra.mxu0 0.0
    %418 = vmatprep.subr.mxu0 0.0
    %419 = vmatpush1.msra.mxu0 0.0
    %420 = vmatprep.subr.mxu0 0.0
    %421 = vmatpush1.msra.mxu0 0.0
    %422 = vmatprep.subr.mxu0 0.0
    %423 = vmatpush1.msra.mxu0 0.0
    %424 = vmatprep.subr.mxu0 0.0
    %425 = vmatpush1.msra.mxu0 0.0
    %426 = vmatprep.subr.mxu0 0.0
    %427 = vmatpush1.msra.mxu0 0.0
    %428 = vmatprep.subr.mxu0 0.0
    %429 = vmatpush1.msra.mxu0 0.0
    %430 = vmatprep.subr.mxu0 0.0
    %431 = vmatpush1.msra.mxu0 0.0
    %432 = vmatprep.subr.mxu0 0.0
    %433 = vmatpush1.msra.mxu0 0.0
    %434 = vmatprep.subr.mxu0 0.0
    %435 = vmatpush1.msra.mxu0 0.0
    %436 = vmatprep.subr.mxu0 0.0
    %437 = vmatpush1.msra.mxu0 0.0
    %438 = vmatprep.subr.mxu0 0.0
    %439 = vmatpush1.msra.mxu0 0.0
    %440 = vmatprep.subr.mxu0 0.0
    %441 = vmatpush1.msra.mxu0 0.0
    %442 = vmatprep.subr.mxu0 0.0
    %443 = vmatpush1.msra.mxu0 0.0
    %444 = vmatprep.subr.mxu0 0.0
    %445 = vmatpush1.msra.mxu0 0.0
    %446 = vmatprep.subr.mxu0 0.0
    %447 = vmatpush1.msra.mxu0 0.0
    %448 = vmatprep.subr.mxu0 0.0
    %449 = vmatpush1.msra.mxu0 0.0
    %450 = vmatprep.subr.mxu0 0.0
    %451 = vmatpush1.msra.mxu0 0.0
    %452 = vmatprep.subr.mxu0 0.0
    %453 = vmatpush1.msra.mxu0 0.0
    %454 = vmatprep.subr.mxu0 0.0
    %455 = vmatpush1.msra.mxu0 0.0
    %456 = vmatprep.subr.mxu0 0.0
    %457 = vmatpush1.msra.mxu0 0.0
    %458 = vmatprep.subr.mxu0 0.0
    %459 = vmatpush1.msra.mxu0 0.0
    %460 = vmatprep.mubr.f32.mxu0 0.0
    %461 = vmatmul.mubr.f32.gmra.mrb[0].mxu0 %v392
    %v462 = vpop.f32.mrb[0].mxu0
    %v463 = vadd.f32 %v384, %v462
    %v464 = vpop.f32.mrb[0].mxu0
    %465 = vmatprep.mubr.f32.mxu0 0.0
    %466 = vmatmul.mubr.f32.gmra.mrb[0].mxu0 %v394
    %v467 = vpop.f32.mrb[0].mxu0
    %v468 = vadd.f32 %v385, %v467
    %v469 = vpop.f32.mrb[0].mxu0
    %470 = vdwg.mxu0
    %v471 = vtanh.pop %v463
    %v472 = vtanh.pop %v468
    %v473 = vxor.u32 %v463, 2147483648
    %v474 = vxor.u32 %v468, 2147483648
    %v475 = vmul.f32 %v473, 1.442695
    %v476 = vpow.pop %v475
    %v477 = vmul.f32 %v474, 1.442695
    %v478 = vpow.pop %v477
    %v479 = vadd.f32 %v476, 1.0
    %v480 = vadd.f32 %v478, 1.0
    %v481 = vrcp.pop %v479
    %v482 = vmul.f32 1.0, %v481
    %v483 = vrcp.pop %v480
    %v484 = vmul.f32 1.0, %v483
    %v485 = vsel %vm248, %v471, %v482
    %v486 = vsel %vm248, %v472, %v484
    %v487 = vmul.f32 %v485, %v370
    %v488 = vmul.f32 %v486, %v371
    %491 = vrot.lane.b32.xlu0 %v485, 64
    %v492 = vpop.permute.xlu0 %491
    %493 = vrot.lane.b32.xlu0 %v486, 64
    %v494 = vpop.permute.xlu0 %493
    %v497 = vmul.f32 %v485, %v492
    %v498 = vmul.f32 %v486, %v494
    %501 = vrot.lane.b32.xlu0 %v497, 32
    %v502 = vpop.permute.xlu0 %501
    %503 = vrot.lane.b32.xlu0 %v498, 32
    %v504 = vpop.permute.xlu0 %503
    %v507 = vadd.f32 %v487, %v502
    %v508 = vadd.f32 %v488, %v504
    %v509 = vtanh.pop %v507
    %v510 = vtanh.pop %v508
    %513 = vrot.lane.b32.xlu0 %v509, 64
    %v514 = vpop.permute.xlu0 %513
    %515 = vrot.lane.b32.xlu0 %v510, 64
    %v516 = vpop.permute.xlu0 %515
    %v519 = vmul.f32 %v485, %v514
    %v520 = vmul.f32 %v486, %v516
    %v521 = vsel %vm245, %v183, %v203
    %v522 = vsel %vm245, %v188, %v208
    %525 = vrot.lane.b32.xlu0 %v519, 32
    %v526 = vpop.permute.xlu0 %525
    %527 = vrot.lane.b32.xlu0 %v520, 32
    %v528 = vpop.permute.xlu0 %527
    %v529 = vsel %vm255, %v526, 0
    %v531 = vsel %vm255, %v528, 0
    %533 = vmatprep.subr.mxu0 0.0
    %534 = vmatpush1.msra.mxu0 %v249
    %535 = vmatprep.subr.mxu0 0.0
    %536 = vmatpush1.msra.mxu0 %v250
    %537 = vmatprep.subr.mxu0 0.0
    %538 = vmatpush1.msra.mxu0 %v251
    %539 = vmatprep.subr.mxu0 0.0
    %540 = vmatpush1.msra.mxu0 %v252
    %541 = vmatprep.subr.mxu0 0.0
    %542 = vmatpush1.msra.mxu0 0.0
    %543 = vmatprep.subr.mxu0 0.0
    %544 = vmatpush1.msra.mxu0 0.0
    %545 = vmatprep.subr.mxu0 0.0
    %546 = vmatpush1.msra.mxu0 0.0
    %547 = vmatprep.subr.mxu0 0.0
    %548 = vmatpush1.msra.mxu0 0.0
    %549 = vmatprep.subr.mxu0 0.0
    %550 = vmatpush1.msra.mxu0 0.0
    %551 = vmatprep.subr.mxu0 0.0
    %552 = vmatpush1.msra.mxu0 0.0
    %553 = vmatprep.subr.mxu0 0.0
    %554 = vmatpush1.msra.mxu0 0.0
    %555 = vmatprep.subr.mxu0 0.0
    %556 = vmatpush1.msra.mxu0 0.0
    %557 = vmatprep.subr.mxu0 0.0
    %558 = vmatpush1.msra.mxu0 0.0
    %559 = vmatprep.subr.mxu0 0.0
    %560 = vmatpush1.msra.mxu0 0.0
    %561 = vmatprep.subr.mxu0 0.0
    %562 = vmatpush1.msra.mxu0 0.0
    %563 = vmatprep.subr.mxu0 0.0
    %564 = vmatpush1.msra.mxu0 0.0
    %565 = vmatprep.subr.mxu0 0.0
    %566 = vmatpush1.msra.mxu0 0.0
    %567 = vmatprep.subr.mxu0 0.0
    %568 = vmatpush1.msra.mxu0 0.0
    %569 = vmatprep.subr.mxu0 0.0
    %570 = vmatpush1.msra.mxu0 0.0
    %571 = vmatprep.subr.mxu0 0.0
    %572 = vmatpush1.msra.mxu0 0.0
    %573 = vmatprep.subr.mxu0 0.0
    %574 = vmatpush1.msra.mxu0 0.0
    %575 = vmatprep.subr.mxu0 0.0
    %576 = vmatpush1.msra.mxu0 0.0
    %577 = vmatprep.subr.mxu0 0.0
    %578 = vmatpush1.msra.mxu0 0.0
    %579 = vmatprep.subr.mxu0 0.0
    %580 = vmatpush1.msra.mxu0 0.0
    %581 = vmatprep.subr.mxu0 0.0
    %582 = vmatpush1.msra.mxu0 0.0
    %583 = vmatprep.subr.mxu0 0.0
    %584 = vmatpush1.msra.mxu0 0.0
    %585 = vmatprep.subr.mxu0 0.0
    %586 = vmatpush1.msra.mxu0 0.0
    %587 = vmatprep.subr.mxu0 0.0
    %588 = vmatpush1.msra.mxu0 0.0
    %589 = vmatprep.subr.mxu0 0.0
    %590 = vmatpush1.msra.mxu0 0.0
    %591 = vmatprep.subr.mxu0 0.0
    %592 = vmatpush1.msra.mxu0 0.0
    %593 = vmatprep.subr.mxu0 0.0
    %594 = vmatpush1.msra.mxu0 0.0
    %595 = vmatprep.subr.mxu0 0.0
    %596 = vmatpush1.msra.mxu0 0.0
    %597 = vmatprep.mubr.f32.mxu0 0.0
    %598 = vmatmul.mubr.f32.gmra.mrb[0].mxu0 %v529
    %v599 = vpop.f32.mrb[0].mxu0
    %v600 = vadd.f32 %v521, %v599
    %v601 = vpop.f32.mrb[0].mxu0
    %602 = vmatprep.mubr.f32.mxu0 0.0
    %603 = vmatmul.mubr.f32.gmra.mrb[0].mxu0 %v531
    %v604 = vpop.f32.mrb[0].mxu0
    %v605 = vadd.f32 %v522, %v604
    %v606 = vpop.f32.mrb[0].mxu0
    %607 = vdwg.mxu0
    %v608 = vtanh.pop %v600
    %v609 = vtanh.pop %v605
    %v610 = vxor.u32 %v600, 2147483648
    %v611 = vxor.u32 %v605, 2147483648
    %v612 = vmul.f32 %v610, 1.442695
    %v613 = vpow.pop %v612
    %v614 = vmul.f32 %v611, 1.442695
    %v615 = vpow.pop %v614
    %v616 = vadd.f32 %v613, 1.0
    %v617 = vadd.f32 %v615, 1.0
    %v618 = vrcp.pop %v616
    %v619 = vmul.f32 1.0, %v618
    %v620 = vrcp.pop %v617
    %v621 = vmul.f32 1.0, %v620
    %v622 = vsel %vm248, %v608, %v619
    %v623 = vsel %vm248, %v609, %v621
    %v624 = vmul.f32 %v622, %v507
    %v625 = vmul.f32 %v623, %v508
    %628 = vrot.lane.b32.xlu0 %v622, 64
    %v629 = vpop.permute.xlu0 %628
    %630 = vrot.lane.b32.xlu0 %v623, 64
    %v631 = vpop.permute.xlu0 %630
    %v634 = vmul.f32 %v622, %v629
    %v635 = vmul.f32 %v623, %v631
    %638 = vrot.lane.b32.xlu0 %v634, 32
    %v639 = vpop.permute.xlu0 %638
    %640 = vrot.lane.b32.xlu0 %v635, 32
    %v641 = vpop.permute.xlu0 %640
    %v644 = vadd.f32 %v624, %v639
    %v645 = vadd.f32 %v625, %v641
    %v646 = vtanh.pop %v644
    %v647 = vtanh.pop %v645
    %650 = vrot.lane.b32.xlu0 %v646, 64
    %v651 = vpop.permute.xlu0 %650
    %652 = vrot.lane.b32.xlu0 %v647, 64
    %v653 = vpop.permute.xlu0 %652
    %v656 = vmul.f32 %v622, %v651
    %v657 = vmul.f32 %v623, %v653
    %660 = vrot.lane.b32.xlu0 %v656, 32
    %v661 = vpop.permute.xlu0 %660
    %662 = vrot.lane.b32.xlu0 %v657, 32
    %v663 = vpop.permute.xlu0 %662
    %v664 = vsel %vm255, %v661, 0
    %v666 = vsel %vm255, %v663, 0
    %668 = vmatprep.subr.mxu0 0.0
    %669 = vmatpush1.msra.mxu0 %v249
    %670 = vmatprep.subr.mxu0 0.0
    %671 = vmatpush1.msra.mxu0 %v250
    %672 = vmatprep.subr.mxu0 0.0
    %673 = vmatpush1.msra.mxu0 %v251
    %674 = vmatprep.subr.mxu0 0.0
    %675 = vmatpush1.msra.mxu0 %v252
    %676 = vmatprep.subr.mxu0 0.0
    %677 = vmatpush1.msra.mxu0 0.0
    %678 = vmatprep.subr.mxu0 0.0
    %679 = vmatpush1.msra.mxu0 0.0
    %680 = vmatprep.subr.mxu0 0.0
    %681 = vmatpush1.msra.mxu0 0.0
    %682 = vmatprep.subr.mxu0 0.0
    %683 = vmatpush1.msra.mxu0 0.0
    %684 = vmatprep.subr.mxu0 0.0
    %685 = vmatpush1.msra.mxu0 0.0
    %686 = vmatprep.subr.mxu0 0.0
    %687 = vmatpush1.msra.mxu0 0.0
    %688 = vmatprep.subr.mxu0 0.0
    %689 = vmatpush1.msra.mxu0 0.0
    %690 = vmatprep.subr.mxu0 0.0
    %691 = vmatpush1.msra.mxu0 0.0
    %692 = vmatprep.subr.mxu0 0.0
    %693 = vmatpush1.msra.mxu0 0.0
    %694 = vmatprep.subr.mxu0 0.0
    %695 = vmatpush1.msra.mxu0 0.0
    %696 = vmatprep.subr.mxu0 0.0
    %697 = vmatpush1.msra.mxu0 0.0
    %698 = vmatprep.subr.mxu0 0.0
    %699 = vmatpush1.msra.mxu0 0.0
    %700 = vmatprep.subr.mxu0 0.0
    %701 = vmatpush1.msra.mxu0 0.0
    %702 = vmatprep.subr.mxu0 0.0
    %703 = vmatpush1.msra.mxu0 0.0
    %704 = vmatprep.subr.mxu0 0.0
    %705 = vmatpush1.msra.mxu0 0.0
    %706 = vmatprep.subr.mxu0 0.0
    %707 = vmatpush1.msra.mxu0 0.0
    %708 = vmatprep.subr.mxu0 0.0
    %709 = vmatpush1.msra.mxu0 0.0
    %710 = vmatprep.subr.mxu0 0.0
    %711 = vmatpush1.msra.mxu0 0.0
    %712 = vmatprep.subr.mxu0 0.0
    %713 = vmatpush1.msra.mxu0 0.0
    %714 = vmatprep.subr.mxu0 0.0
    %715 = vmatpush1.msra.mxu0 0.0
    %716 = vmatprep.subr.mxu0 0.0
    %717 = vmatpush1.msra.mxu0 0.0
    %718 = vmatprep.subr.mxu0 0.0
    %719 = vmatpush1.msra.mxu0 0.0
    %720 = vmatprep.subr.mxu0 0.0
    %721 = vmatpush1.msra.mxu0 0.0
    %722 = vmatprep.subr.mxu0 0.0
    %723 = vmatpush1.msra.mxu0 0.0
    %724 = vmatprep.subr.mxu0 0.0
    %725 = vmatpush1.msra.mxu0 0.0
    %726 = vmatprep.subr.mxu0 0.0
    %727 = vmatpush1.msra.mxu0 0.0
    %728 = vmatprep.subr.mxu0 0.0
    %729 = vmatpush1.msra.mxu0 0.0
    %730 = vmatprep.subr.mxu0 0.0
    %731 = vmatpush1.msra.mxu0 0.0
    %732 = vmatprep.mubr.f32.mxu0 0.0
    %733 = vmatmul.mubr.f32.gmra.mrb[0].mxu0 %v664
    %v734 = vpop.f32.mrb[0].mxu0
    %v735 = vadd.f32 %v193, %v734
    %v736 = vpop.f32.mrb[0].mxu0
    %737 = vmatprep.mubr.f32.mxu0 0.0
    %738 = vmatmul.mubr.f32.gmra.mrb[0].mxu0 %v666
    %v739 = vpop.f32.mrb[0].mxu0
    %v740 = vadd.f32 %v198, %v739
    %v741 = vpop.f32.mrb[0].mxu0
    %742 = vdwg.mxu0
    %v743 = vtanh.pop %v735
    %v744 = vtanh.pop %v740
    %v745 = vxor.u32 %v735, 2147483648
    %v746 = vxor.u32 %v740, 2147483648
    %v747 = vmul.f32 %v745, 1.442695
    %v748 = vpow.pop %v747
    %v749 = vmul.f32 %v746, 1.442695
    %v750 = vpow.pop %v749
    %v751 = vadd.f32 %v748, 1.0
    %v752 = vadd.f32 %v750, 1.0
    %v753 = vrcp.pop %v751
    %v754 = vmul.f32 1.0, %v753
    %v755 = vrcp.pop %v752
    %v756 = vmul.f32 1.0, %v755
    %v757 = vsel %vm248, %v743, %v754
    %v758 = vsel %vm248, %v744, %v756
    %v759 = vmul.f32 %v757, %v644
    %v760 = vmul.f32 %v758, %v645
    %763 = vrot.lane.b32.xlu0 %v757, 64
    %v764 = vpop.permute.xlu0 %763
    %765 = vrot.lane.b32.xlu0 %v758, 64
    %v766 = vpop.permute.xlu0 %765
    %v769 = vmul.f32 %v757, %v764
    %v770 = vmul.f32 %v758, %v766
    %773 = vrot.lane.b32.xlu0 %v769, 32
    %v774 = vpop.permute.xlu0 %773
    %775 = vrot.lane.b32.xlu0 %v770, 32
    %v776 = vpop.permute.xlu0 %775
    %v779 = vadd.f32 %v759, %v774
    %v780 = vadd.f32 %v760, %v776
    %v781 = vtanh.pop %v779
    %v782 = vtanh.pop %v780
    %785 = vrot.lane.b32.xlu0 %v781, 64
    %v786 = vpop.permute.xlu0 %785
    %787 = vrot.lane.b32.xlu0 %v782, 64
    %v788 = vpop.permute.xlu0 %787
    %v791 = vmul.f32 %v757, %v786
    %v792 = vmul.f32 %v758, %v788
    %v793 = vsel %vm245, %v203, %v183
    %v794 = vsel %vm245, %v208, %v188
    %797 = vrot.lane.b32.xlu0 %v791, 32
    %v798 = vpop.permute.xlu0 %797
    %799 = vrot.lane.b32.xlu0 %v792, 32
    %v800 = vpop.permute.xlu0 %799
    %v801 = vsel %vm255, %v798, 0
    %v803 = vsel %vm255, %v800, 0
    %805 = vmatprep.subr.mxu0 0.0
    %806 = vmatpush1.msra.mxu0 %v249
    %807 = vmatprep.subr.mxu0 0.0
    %808 = vmatpush1.msra.mxu0 %v250
    %809 = vmatprep.subr.mxu0 0.0
    %810 = vmatpush1.msra.mxu0 %v251
    %811 = vmatprep.subr.mxu0 0.0
    %812 = vmatpush1.msra.mxu0 %v252
    %813 = vmatprep.subr.mxu0 0.0
    %814 = vmatpush1.msra.mxu0 0.0
    %815 = vmatprep.subr.mxu0 0.0
    %816 = vmatpush1.msra.mxu0 0.0
    %817 = vmatprep.subr.mxu0 0.0
    %818 = vmatpush1.msra.mxu0 0.0
    %819 = vmatprep.subr.mxu0 0.0
    %820 = vmatpush1.msra.mxu0 0.0
    %821 = vmatprep.subr.mxu0 0.0
    %822 = vmatpush1.msra.mxu0 0.0
    %823 = vmatprep.subr.mxu0 0.0
    %824 = vmatpush1.msra.mxu0 0.0
    %825 = vmatprep.subr.mxu0 0.0
    %826 = vmatpush1.msra.mxu0 0.0
    %827 = vmatprep.subr.mxu0 0.0
    %828 = vmatpush1.msra.mxu0 0.0
    %829 = vmatprep.subr.mxu0 0.0
    %830 = vmatpush1.msra.mxu0 0.0
    %831 = vmatprep.subr.mxu0 0.0
    %832 = vmatpush1.msra.mxu0 0.0
    %833 = vmatprep.subr.mxu0 0.0
    %834 = vmatpush1.msra.mxu0 0.0
    %835 = vmatprep.subr.mxu0 0.0
    %836 = vmatpush1.msra.mxu0 0.0
    %837 = vmatprep.subr.mxu0 0.0
    %838 = vmatpush1.msra.mxu0 0.0
    %839 = vmatprep.subr.mxu0 0.0
    %840 = vmatpush1.msra.mxu0 0.0
    %841 = vmatprep.subr.mxu0 0.0
    %842 = vmatpush1.msra.mxu0 0.0
    %843 = vmatprep.subr.mxu0 0.0
    %844 = vmatpush1.msra.mxu0 0.0
    %845 = vmatprep.subr.mxu0 0.0
    %846 = vmatpush1.msra.mxu0 0.0
    %847 = vmatprep.subr.mxu0 0.0
    %848 = vmatpush1.msra.mxu0 0.0
    %849 = vmatprep.subr.mxu0 0.0
    %850 = vmatpush1.msra.mxu0 0.0
    %851 = vmatprep.subr.mxu0 0.0
    %852 = vmatpush1.msra.mxu0 0.0
    %853 = vmatprep.subr.mxu0 0.0
    %854 = vmatpush1.msra.mxu0 0.0
    %855 = vmatprep.subr.mxu0 0.0
    %856 = vmatpush1.msra.mxu0 0.0
    %857 = vmatprep.subr.mxu0 0.0
    %858 = vmatpush1.msra.mxu0 0.0
    %859 = vmatprep.subr.mxu0 0.0
    %860 = vmatpush1.msra.mxu0 0.0
    %861 = vmatprep.subr.mxu0 0.0
    %862 = vmatpush1.msra.mxu0 0.0
    %863 = vmatprep.subr.mxu0 0.0
    %864 = vmatpush1.msra.mxu0 0.0
    %865 = vmatprep.subr.mxu0 0.0
    %866 = vmatpush1.msra.mxu0 0.0
    %867 = vmatprep.subr.mxu0 0.0
    %868 = vmatpush1.msra.mxu0 0.0
    %869 = vmatprep.mubr.f32.mxu0 0.0
    %870 = vmatmul.mubr.f32.gmra.mrb[0].mxu0 %v801
    %v871 = vpop.f32.mrb[0].mxu0
    %v872 = vadd.f32 %v793, %v871
    %v873 = vpop.f32.mrb[0].mxu0
    %874 = vmatprep.mubr.f32.mxu0 0.0
    %875 = vmatmul.mubr.f32.gmra.mrb[0].mxu0 %v803
    %v876 = vpop.f32.mrb[0].mxu0
    %v877 = vadd.f32 %v794, %v876
    %v878 = vpop.f32.mrb[0].mxu0
    %879 = vdwg.mxu0
    %v880 = vtanh.pop %v872
    %v881 = vtanh.pop %v877
    %v882 = vxor.u32 %v872, 2147483648
    %v883 = vxor.u32 %v877, 2147483648
    %v884 = vmul.f32 %v882, 1.442695
    %v885 = vpow.pop %v884
    %v886 = vmul.f32 %v883, 1.442695
    %v887 = vpow.pop %v886
    %v888 = vadd.f32 %v885, 1.0
    %v889 = vadd.f32 %v887, 1.0
    %v890 = vrcp.pop %v888
    %v891 = vmul.f32 1.0, %v890
    %v892 = vrcp.pop %v889
    %v893 = vmul.f32 1.0, %v892
    %v894 = vsel %vm248, %v880, %v891
    %v895 = vsel %vm248, %v881, %v893
    %v896 = vmul.f32 %v894, %v779
    %v897 = vmul.f32 %v895, %v780
    %900 = vrot.lane.b32.xlu0 %v894, 64
    %v901 = vpop.permute.xlu0 %900
    %902 = vrot.lane.b32.xlu0 %v895, 64
    %v903 = vpop.permute.xlu0 %902
    %v906 = vmul.f32 %v894, %v901
    %v907 = vmul.f32 %v895, %v903
    %910 = vrot.lane.b32.xlu0 %v906, 32
    %v911 = vpop.permute.xlu0 %910
    %912 = vrot.lane.b32.xlu0 %v907, 32
    %v913 = vpop.permute.xlu0 %912
    %v916 = vadd.f32 %v896, %v911
    %v917 = vadd.f32 %v897, %v913
    %v918 = vtanh.pop %v916
    %v919 = vtanh.pop %v917
    %922 = vrot.lane.b32.xlu0 %v918, 64
    %v923 = vpop.permute.xlu0 %922
    %924 = vrot.lane.b32.xlu0 %v919, 64
    %v925 = vpop.permute.xlu0 %924
    %v928 = vmul.f32 %v894, %v923
    %v929 = vmul.f32 %v895, %v925
    %v930 = vsel %vm245, %v213, %v173
    %v931 = vsel %vm245, %v218, %v178
    %934 = vrot.lane.b32.xlu0 %v928, 32
    %v935 = vpop.permute.xlu0 %934
    %936 = vrot.lane.b32.xlu0 %v929, 32
    %v937 = vpop.permute.xlu0 %936
    %v938 = vsel %vm255, %v935, 0
    %v940 = vsel %vm255, %v937, 0
    %942 = vmatprep.subr.mxu0 0.0
    %943 = vmatpush1.msra.mxu0 %v249
    %944 = vmatprep.subr.mxu0 0.0
    %945 = vmatpush1.msra.mxu0 %v250
    %946 = vmatprep.subr.mxu0 0.0
    %947 = vmatpush1.msra.mxu0 %v251
    %948 = vmatprep.subr.mxu0 0.0
    %949 = vmatpush1.msra.mxu0 %v252
    %950 = vmatprep.subr.mxu0 0.0
    %951 = vmatpush1.msra.mxu0 0.0
    %952 = vmatprep.subr.mxu0 0.0
    %953 = vmatpush1.msra.mxu0 0.0
    %954 = vmatprep.subr.mxu0 0.0
    %955 = vmatpush1.msra.mxu0 0.0
    %956 = vmatprep.subr.mxu0 0.0
    %957 = vmatpush1.msra.mxu0 0.0
    %958 = vmatprep.subr.mxu0 0.0
    %959 = vmatpush1.msra.mxu0 0.0
    %960 = vmatprep.subr.mxu0 0.0
    %961 = vmatpush1.msra.mxu0 0.0
    %962 = vmatprep.subr.mxu0 0.0
    %963 = vmatpush1.msra.mxu0 0.0
    %964 = vmatprep.subr.mxu0 0.0
    %965 = vmatpush1.msra.mxu0 0.0
    %966 = vmatprep.subr.mxu0 0.0
    %967 = vmatpush1.msra.mxu0 0.0
    %968 = vmatprep.subr.mxu0 0.0
    %969 = vmatpush1.msra.mxu0 0.0
    %970 = vmatprep.subr.mxu0 0.0
    %971 = vmatpush1.msra.mxu0 0.0
    %972 = vmatprep.subr.mxu0 0.0
    %973 = vmatpush1.msra.mxu0 0.0
    %974 = vmatprep.subr.mxu0 0.0
    %975 = vmatpush1.msra.mxu0 0.0
    %976 = vmatprep.subr.mxu0 0.0
    %977 = vmatpush1.msra.mxu0 0.0
    %978 = vmatprep.subr.mxu0 0.0
    %979 = vmatpush1.msra.mxu0 0.0
    %980 = vmatprep.subr.mxu0 0.0
    %981 = vmatpush1.msra.mxu0 0.0
    %982 = vmatprep.subr.mxu0 0.0
    %983 = vmatpush1.msra.mxu0 0.0
    %984 = vmatprep.subr.mxu0 0.0
    %985 = vmatpush1.msra.mxu0 0.0
    %986 = vmatprep.subr.mxu0 0.0
    %987 = vmatpush1.msra.mxu0 0.0
    %988 = vmatprep.subr.mxu0 0.0
    %989 = vmatpush1.msra.mxu0 0.0
    %990 = vmatprep.subr.mxu0 0.0
    %991 = vmatpush1.msra.mxu0 0.0
    %992 = vmatprep.subr.mxu0 0.0
    %993 = vmatpush1.msra.mxu0 0.0
    %994 = vmatprep.subr.mxu0 0.0
    %995 = vmatpush1.msra.mxu0 0.0
    %996 = vmatprep.subr.mxu0 0.0
    %997 = vmatpush1.msra.mxu0 0.0
    %998 = vmatprep.subr.mxu0 0.0
    %999 = vmatpush1.msra.mxu0 0.0
    %1000 = vmatprep.subr.mxu0 0.0
    %1001 = vmatpush1.msra.mxu0 0.0
    %1002 = vmatprep.subr.mxu0 0.0
    %1003 = vmatpush1.msra.mxu0 0.0
    %1004 = vmatprep.subr.mxu0 0.0
    %1005 = vmatpush1.msra.mxu0 0.0
    %1006 = vmatprep.mubr.f32.mxu0 0.0
    %1007 = vmatmul.mubr.f32.gmra.mrb[0].mxu0 %v938
    %v1008 = vpop.f32.mrb[0].mxu0
    %v1009 = vadd.f32 %v930, %v1008
    %v1010 = vpop.f32.mrb[0].mxu0
    %1011 = vmatprep.mubr.f32.mxu0 0.0
    %1012 = vmatmul.mubr.f32.gmra.mrb[0].mxu0 %v940
    %v1013 = vpop.f32.mrb[0].mxu0
    %v1014 = vadd.f32 %v931, %v1013
    %v1015 = vpop.f32.mrb[0].mxu0
    %1016 = vdwg.mxu0
    %v1017 = vtanh.pop %v1009
    %v1018 = vtanh.pop %v1014
    %v1019 = vxor.u32 %v1009, 2147483648
    %v1020 = vxor.u32 %v1014, 2147483648
    %v1021 = vmul.f32 %v1019, 1.442695
    %v1022 = vpow.pop %v1021
    %v1023 = vmul.f32 %v1020, 1.442695
    %v1024 = vpow.pop %v1023
    %v1025 = vadd.f32 %v1022, 1.0
    %v1026 = vadd.f32 %v1024, 1.0
    %v1027 = vrcp.pop %v1025
    %v1028 = vmul.f32 1.0, %v1027
    %v1029 = vrcp.pop %v1026
    %v1030 = vmul.f32 1.0, %v1029
    %v1031 = vsel %vm248, %v1017, %v1028
    %v1032 = vsel %vm248, %v1018, %v1030
    %v1033 = vmul.f32 %v1031, %v916
    %v1034 = vmul.f32 %v1032, %v917
    %1037 = vrot.lane.b32.xlu0 %v1031, 64
    %v1038 = vpop.permute.xlu0 %1037
    %1039 = vrot.lane.b32.xlu0 %v1032, 64
    %v1040 = vpop.permute.xlu0 %1039
    %v1043 = vmul.f32 %v1031, %v1038
    %v1044 = vmul.f32 %v1032, %v1040
    %1047 = vrot.lane.b32.xlu0 %v1043, 32
    %v1048 = vpop.permute.xlu0 %1047
    %1049 = vrot.lane.b32.xlu0 %v1044, 32
    %v1050 = vpop.permute.xlu0 %1049
    %v1053 = vadd.f32 %v1033, %v1048
    %v1054 = vadd.f32 %v1034, %v1050
    %v1055 = vtanh.pop %v1053
    %v1056 = vtanh.pop %v1054
    %1059 = vrot.lane.b32.xlu0 %v1055, 64
    %v1060 = vpop.permute.xlu0 %1059
    %1061 = vrot.lane.b32.xlu0 %v1056, 64
    %v1062 = vpop.permute.xlu0 %1061
    %v1065 = vmul.f32 %v1031, %v1060
    %v1066 = vmul.f32 %v1032, %v1062
    %v1067 = vsel %vm245, %v223, %v163
    %v1068 = vsel %vm245, %v228, %v168
    %1071 = vrot.lane.b32.xlu0 %v1065, 32
    %v1072 = vpop.permute.xlu0 %1071
    %1073 = vrot.lane.b32.xlu0 %v1066, 32
    %v1074 = vpop.permute.xlu0 %1073
    %v1075 = vsel %vm255, %v1072, 0
    %v1077 = vsel %vm255, %v1074, 0
    %1079 = vmatprep.subr.mxu0 0.0
    %1080 = vmatpush1.msra.mxu0 %v249
    %1081 = vmatprep.subr.mxu0 0.0
    %1082 = vmatpush1.msra.mxu0 %v250
    %1083 = vmatprep.subr.mxu0 0.0
    %1084 = vmatpush1.msra.mxu0 %v251
    %1085 = vmatprep.subr.mxu0 0.0
    %1086 = vmatpush1.msra.mxu0 %v252
    %1087 = vmatprep.subr.mxu0 0.0
    %1088 = vmatpush1.msra.mxu0 0.0
    %1089 = vmatprep.subr.mxu0 0.0
    %1090 = vmatpush1.msra.mxu0 0.0
    %1091 = vmatprep.subr.mxu0 0.0
    %1092 = vmatpush1.msra.mxu0 0.0
    %1093 = vmatprep.subr.mxu0 0.0
    %1094 = vmatpush1.msra.mxu0 0.0
    %1095 = vmatprep.subr.mxu0 0.0
    %1096 = vmatpush1.msra.mxu0 0.0
    %1097 = vmatprep.subr.mxu0 0.0
    %1098 = vmatpush1.msra.mxu0 0.0
    %1099 = vmatprep.subr.mxu0 0.0
    %1100 = vmatpush1.msra.mxu0 0.0
    %1101 = vmatprep.subr.mxu0 0.0
    %1102 = vmatpush1.msra.mxu0 0.0
    %1103 = vmatprep.subr.mxu0 0.0
    %1104 = vmatpush1.msra.mxu0 0.0
    %1105 = vmatprep.subr.mxu0 0.0
    %1106 = vmatpush1.msra.mxu0 0.0
    %1107 = vmatprep.subr.mxu0 0.0
    %1108 = vmatpush1.msra.mxu0 0.0
    %1109 = vmatprep.subr.mxu0 0.0
    %1110 = vmatpush1.msra.mxu0 0.0
    %1111 = vmatprep.subr.mxu0 0.0
    %1112 = vmatpush1.msra.mxu0 0.0
    %1113 = vmatprep.subr.mxu0 0.0
    %1114 = vmatpush1.msra.mxu0 0.0
    %1115 = vmatprep.subr.mxu0 0.0
    %1116 = vmatpush1.msra.mxu0 0.0
    %1117 = vmatprep.subr.mxu0 0.0
    %1118 = vmatpush1.msra.mxu0 0.0
    %1119 = vmatprep.subr.mxu0 0.0
    %1120 = vmatpush1.msra.mxu0 0.0
    %1121 = vmatprep.subr.mxu0 0.0
    %1122 = vmatpush1.msra.mxu0 0.0
    %1123 = vmatprep.subr.mxu0 0.0
    %1124 = vmatpush1.msra.mxu0 0.0
    %1125 = vmatprep.subr.mxu0 0.0
    %1126 = vmatpush1.msra.mxu0 0.0
    %1127 = vmatprep.subr.mxu0 0.0
    %1128 = vmatpush1.msra.mxu0 0.0
    %1129 = vmatprep.subr.mxu0 0.0
    %1130 = vmatpush1.msra.mxu0 0.0
    %1131 = vmatprep.subr.mxu0 0.0
    %1132 = vmatpush1.msra.mxu0 0.0
    %1133 = vmatprep.subr.mxu0 0.0
    %1134 = vmatpush1.msra.mxu0 0.0
    %1135 = vmatprep.subr.mxu0 0.0
    %1136 = vmatpush1.msra.mxu0 0.0
    %1137 = vmatprep.subr.mxu0 0.0
    %1138 = vmatpush1.msra.mxu0 0.0
    %1139 = vmatprep.subr.mxu0 0.0
    %1140 = vmatpush1.msra.mxu0 0.0
    %1141 = vmatprep.subr.mxu0 0.0
    %1142 = vmatpush1.msra.mxu0 0.0
    %1143 = vmatprep.mubr.f32.mxu0 0.0
    %1144 = vmatmul.mubr.f32.gmra.mrb[0].mxu0 %v1075
    %v1145 = vpop.f32.mrb[0].mxu0
    %v1146 = vadd.f32 %v1067, %v1145
    %v1147 = vpop.f32.mrb[0].mxu0
    %1148 = vmatprep.mubr.f32.mxu0 0.0
    %1149 = vmatmul.mubr.f32.gmra.mrb[0].mxu0 %v1077
    %v1150 = vpop.f32.mrb[0].mxu0
    %v1151 = vadd.f32 %v1068, %v1150
    %v1152 = vpop.f32.mrb[0].mxu0
    %1153 = vdwg.mxu0
    %v1154 = vtanh.pop %v1146
    %v1155 = vtanh.pop %v1151
    %v1156 = vxor.u32 %v1146, 2147483648
    %v1157 = vxor.u32 %v1151, 2147483648
    %v1158 = vmul.f32 %v1156, 1.442695
    %v1159 = vpow.pop %v1158
    %v1160 = vmul.f32 %v1157, 1.442695
    %v1161 = vpow.pop %v1160
    %v1162 = vadd.f32 %v1159, 1.0
    %v1163 = vadd.f32 %v1161, 1.0
    %v1164 = vrcp.pop %v1162
    %v1165 = vmul.f32 1.0, %v1164
    %v1166 = vrcp.pop %v1163
    %v1167 = vmul.f32 1.0, %v1166
    %v1168 = vsel %vm248, %v1154, %v1165
    %v1169 = vsel %vm248, %v1155, %v1167
    %v1170 = vmul.f32 %v1168, %v1053
    %v1171 = vmul.f32 %v1169, %v1054
    %1174 = vrot.lane.b32.xlu0 %v1168, 64
    %v1175 = vpop.permute.xlu0 %1174
    %1176 = vrot.lane.b32.xlu0 %v1169, 64
    %v1177 = vpop.permute.xlu0 %1176
    %v1180 = vmul.f32 %v1168, %v1175
    %v1181 = vmul.f32 %v1169, %v1177
    %1184 = vrot.lane.b32.xlu0 %v1180, 32
    %v1185 = vpop.permute.xlu0 %1184
    %1186 = vrot.lane.b32.xlu0 %v1181, 32
    %v1187 = vpop.permute.xlu0 %1186
    %v1190 = vadd.f32 %v1170, %v1185
    %v1191 = vadd.f32 %v1171, %v1187
    %v1192 = vtanh.pop %v1190
    %v1193 = vtanh.pop %v1191
    %1196 = vrot.lane.b32.xlu0 %v1192, 64
    %v1197 = vpop.permute.xlu0 %1196
    %1198 = vrot.lane.b32.xlu0 %v1193, 64
    %v1199 = vpop.permute.xlu0 %1198
    %v1202 = vmul.f32 %v1168, %v1197
    %v1203 = vmul.f32 %v1169, %v1199
    %v1204 = vld [vmem:[%s1] sm:$0xff]
    %v1205 = vld [vmem:[%s1 + $0x8] sm:$0xff]
    %v1206 = vld [vmem:[%s5] sm:$0xff]
    %v1207 = vld [vmem:[%s5 + $0x8] sm:$0xff]
    %v1208 = vld [vmem:[%s5 + $0x10] sm:$0xff]
    %v1209 = vld [vmem:[%s5 + $0x18] sm:$0xff]
    %v1210 = vld [vmem:[%s6] sm:$0xff]
    %v1211 = vld [vmem:[%s6 + $0x8] sm:$0xff]
    %v1212 = vld [vmem:[%s6 + $0x10] sm:$0xff]
    %v1213 = vld [vmem:[%s6 + $0x18] sm:$0xff]
    %1216 = vrot.lane.b32.xlu0 %v1202, 32
    %v1217 = vpop.permute.xlu0 %1216
    %1218 = vrot.lane.b32.xlu0 %v1203, 32
    %v1219 = vpop.permute.xlu0 %1218
    %v1220 = vsel %vm255, %v1217, 0
    %v1222 = vsel %vm255, %v1219, 0
    %1224 = vmatprep.subr.mxu0 0.0
    %1225 = vmatpush1.msra.mxu0 %v1210
    %1226 = vmatprep.subr.mxu0 0.0
    %1227 = vmatpush1.msra.mxu0 %v1211
    %1228 = vmatprep.subr.mxu0 0.0
    %1229 = vmatpush1.msra.mxu0 %v1212
    %1230 = vmatprep.subr.mxu0 0.0
    %1231 = vmatpush1.msra.mxu0 %v1213
    %1232 = vmatprep.subr.mxu0 0.0
    %1233 = vmatpush1.msra.mxu0 0.0
    %1234 = vmatprep.subr.mxu0 0.0
    %1235 = vmatpush1.msra.mxu0 0.0
    %1236 = vmatprep.subr.mxu0 0.0
    %1237 = vmatpush1.msra.mxu0 0.0
    %1238 = vmatprep.subr.mxu0 0.0
    %1239 = vmatpush1.msra.mxu0 0.0
    %1240 = vmatprep.subr.mxu0 0.0
    %1241 = vmatpush1.msra.mxu0 0.0
    %1242 = vmatprep.subr.mxu0 0.0
    %1243 = vmatpush1.msra.mxu0 0.0
    %1244 = vmatprep.subr.mxu0 0.0
    %1245 = vmatpush1.msra.mxu0 0.0
    %1246 = vmatprep.subr.mxu0 0.0
    %1247 = vmatpush1.msra.mxu0 0.0
    %1248 = vmatprep.subr.mxu0 0.0
    %1249 = vmatpush1.msra.mxu0 0.0
    %1250 = vmatprep.subr.mxu0 0.0
    %1251 = vmatpush1.msra.mxu0 0.0
    %1252 = vmatprep.subr.mxu0 0.0
    %1253 = vmatpush1.msra.mxu0 0.0
    %1254 = vmatprep.subr.mxu0 0.0
    %1255 = vmatpush1.msra.mxu0 0.0
    %1256 = vmatprep.subr.mxu0 0.0
    %1257 = vmatpush1.msra.mxu0 0.0
    %1258 = vmatprep.subr.mxu0 0.0
    %1259 = vmatpush1.msra.mxu0 0.0
    %1260 = vmatprep.subr.mxu0 0.0
    %1261 = vmatpush1.msra.mxu0 0.0
    %1262 = vmatprep.subr.mxu0 0.0
    %1263 = vmatpush1.msra.mxu0 0.0
    %1264 = vmatprep.subr.mxu0 0.0
    %1265 = vmatpush1.msra.mxu0 0.0
    %1266 = vmatprep.subr.mxu0 0.0
    %1267 = vmatpush1.msra.mxu0 0.0
    %1268 = vmatprep.subr.mxu0 0.0
    %1269 = vmatpush1.msra.mxu0 0.0
    %1270 = vmatprep.subr.mxu0 0.0
    %1271 = vmatpush1.msra.mxu0 0.0
    %1272 = vmatprep.subr.mxu0 0.0
    %1273 = vmatpush1.msra.mxu0 0.0
    %1274 = vmatprep.subr.mxu0 0.0
    %1275 = vmatpush1.msra.mxu0 0.0
    %1276 = vmatprep.subr.mxu0 0.0
    %1277 = vmatpush1.msra.mxu0 0.0
    %1278 = vmatprep.subr.mxu0 0.0
    %1279 = vmatpush1.msra.mxu0 0.0
    %1280 = vmatprep.subr.mxu0 0.0
    %1281 = vmatpush1.msra.mxu0 0.0
    %1282 = vmatprep.subr.mxu0 0.0
    %1283 = vmatpush1.msra.mxu0 0.0
    %1284 = vmatprep.subr.mxu0 0.0
    %1285 = vmatpush1.msra.mxu0 0.0
    %1286 = vmatprep.subr.mxu0 0.0
    %1287 = vmatpush1.msra.mxu0 0.0
    %1288 = vmatprep.mubr.f32.mxu0 0.0
    %1289 = vmatmul.mubr.f32.gmra.mrb[0].mxu0 %v1220
    %v1290 = vpop.f32.mrb[0].mxu0
    %v1291 = vadd.f32 0.0, %v1290
    %v1292 = vpop.f32.mrb[0].mxu0
    %1293 = vmatprep.mubr.f32.mxu0 0.0
    %1294 = vmatmul.mubr.f32.gmra.mrb[0].mxu0 %v1222
    %v1295 = vpop.f32.mrb[0].mxu0
    %v1296 = vadd.f32 0.0, %v1295
    %v1297 = vpop.f32.mrb[0].mxu0
    %1298 = vdwg.mxu0
    %v1300 = vsel %vm255, %v1204, 0
    %v1303 = vsel %vm255, %v1205, 0
    %1305 = vmatprep.subr.mxu0 0.0
    %1306 = vmatpush1.msra.mxu0 %v1206
    %1307 = vmatprep.subr.mxu0 0.0
    %1308 = vmatpush1.msra.mxu0 %v1207
    %1309 = vmatprep.subr.mxu0 0.0
    %1310 = vmatpush1.msra.mxu0 %v1208
    %1311 = vmatprep.subr.mxu0 0.0
    %1312 = vmatpush1.msra.mxu0 %v1209
    %1313 = vmatprep.subr.mxu0 0.0
    %1314 = vmatpush1.msra.mxu0 0.0
    %1315 = vmatprep.subr.mxu0 0.0
    %1316 = vmatpush1.msra.mxu0 0.0
    %1317 = vmatprep.subr.mxu0 0.0
    %1318 = vmatpush1.msra.mxu0 0.0
    %1319 = vmatprep.subr.mxu0 0.0
    %1320 = vmatpush1.msra.mxu0 0.0
    %1321 = vmatprep.subr.mxu0 0.0
    %1322 = vmatpush1.msra.mxu0 0.0
    %1323 = vmatprep.subr.mxu0 0.0
    %1324 = vmatpush1.msra.mxu0 0.0
    %1325 = vmatprep.subr.mxu0 0.0
    %1326 = vmatpush1.msra.mxu0 0.0
    %1327 = vmatprep.subr.mxu0 0.0
    %1328 = vmatpush1.msra.mxu0 0.0
    %1329 = vmatprep.subr.mxu0 0.0
    %1330 = vmatpush1.msra.mxu0 0.0
    %1331 = vmatprep.subr.mxu0 0.0
    %1332 = vmatpush1.msra.mxu0 0.0
    %1333 = vmatprep.subr.mxu0 0.0
    %1334 = vmatpush1.msra.mxu0 0.0
    %1335 = vmatprep.subr.mxu0 0.0
    %1336 = vmatpush1.msra.mxu0 0.0
    %1337 = vmatprep.subr.mxu0 0.0
    %1338 = vmatpush1.msra.mxu0 0.0
    %1339 = vmatprep.subr.mxu0 0.0
    %1340 = vmatpush1.msra.mxu0 0.0
    %1341 = vmatprep.subr.mxu0 0.0
    %1342 = vmatpush1.msra.mxu0 0.0
    %1343 = vmatprep.subr.mxu0 0.0
    %1344 = vmatpush1.msra.mxu0 0.0
    %1345 = vmatprep.subr.mxu0 0.0
    %1346 = vmatpush1.msra.mxu0 0.0
    %1347 = vmatprep.subr.mxu0 0.0
    %1348 = vmatpush1.msra.mxu0 0.0
    %1349 = vmatprep.subr.mxu0 0.0
    %1350 = vmatpush1.msra.mxu0 0.0
    %1351 = vmatprep.subr.mxu0 0.0
    %1352 = vmatpush1.msra.mxu0 0.0
    %1353 = vmatprep.subr.mxu0 0.0
    %1354 = vmatpush1.msra.mxu0 0.0
    %1355 = vmatprep.subr.mxu0 0.0
    %1356 = vmatpush1.msra.mxu0 0.0
    %1357 = vmatprep.subr.mxu0 0.0
    %1358 = vmatpush1.msra.mxu0 0.0
    %1359 = vmatprep.subr.mxu0 0.0
    %1360 = vmatpush1.msra.mxu0 0.0
    %1361 = vmatprep.subr.mxu0 0.0
    %1362 = vmatpush1.msra.mxu0 0.0
    %1363 = vmatprep.subr.mxu0 0.0
    %1364 = vmatpush1.msra.mxu0 0.0
    %1365 = vmatprep.subr.mxu0 0.0
    %1366 = vmatpush1.msra.mxu0 0.0
    %1367 = vmatprep.subr.mxu0 0.0
    %1368 = vmatpush1.msra.mxu0 0.0
    %1369 = vmatprep.mubr.f32.mxu0 0.0
    %1370 = vmatmul.mubr.f32.gmra.mrb[0].mxu0 %v1300
    %v1371 = vpop.f32.mrb[0].mxu0
    %v1372 = vadd.f32 %v1291, %v1371
    %v1373 = vpop.f32.mrb[0].mxu0
    %1374 = vmatprep.mubr.f32.mxu0 0.0
    %1375 = vmatmul.mubr.f32.gmra.mrb[0].mxu0 %v1303
    %v1376 = vpop.f32.mrb[0].mxu0
    %v1377 = vadd.f32 %v1296, %v1376
    %v1378 = vpop.f32.mrb[0].mxu0
    %1379 = vdwg.mxu0
    %v1380 = vld [vmem:[%s7] sm:$0x1]
    %v1382 = vlaneseq
    %v1383 = vshrl.u32 %v1382, 7
    %v1384 = vsub.s32 0, %v1383
    %v1385 = vrot.slane %v1380, %v1384
    %v1387 = vadd.f32 %v1372, %v1385
    %v1388 = vadd.f32 %v1377, %v1385
    %1389 = vst.msk [vmem:[#allocation2] sm:$0xff] %vm255, %v1387
    %1390 = vst.msk [vmem:[#allocation2 + $0x8] sm:$0xff] %vm255, %v1388
    // Predicated region
    $region34: #{tpu_custom_call.1} parent=1 // pred_check
      _
    $region35: #{tpu_custom_call.1} parent=1 // pred_check_branch
      %1392 = sbr.rel (0) target = $region37
    $region36: #{tpu_custom_call.1} parent=1 // pred_region
      %s1394 = ssub.s32 256, 256
      %1395 = vsyncadd [#allocation3], %s1394
      %s1396 = sshll.u32 [#allocation2], 4
      %s1397 = int_to_ptr.vmem [resolvable:$true] %s1396
      %1402 = dma.vmem_to_hbm [thread:$0]  %s1397, 256, %s8, [#allocation3], 128, 128, 8
    $region37: #{tpu_custom_call.1} parent=1 // pred_fallthru
      _
    // Predicated region
    $region38: #{tpu_custom_call.1} parent=1 // pred_check
      _
    $region39: #{tpu_custom_call.1} parent=1 // pred_check_branch
      %1404 = sbr.rel (0) target = $region41
    $region40: #{tpu_custom_call.1} parent=1 // pred_region
      %1405 = dma.done [#allocation3], 256
    $region41: #{tpu_custom_call.1} parent=1 // pred_fallthru
      _
    %1406 = vsyncpa [#allocation3], 1

</llo_original>
